<compile_context>
chip_gen: v6e
topology: v6e:2x2x1
jax: 0.10.0
libtpu: 0.0.40
codegen_flags: <defaults>
</compile_context>

<pallas_src>
import functools

import jax
import jax.numpy as jnp
from jax.experimental import pallas as pl
from jax.experimental.pallas import tpu as pltpu

INPUT_SIZE = 16
OUTPUT_SIZE = 4
HIDDEN_SIZE = 32
SEQ_LEN = 8
BATCH = 2

# bf16 operands for every MXU matmul (f32 accumulate, f32 elementwise/EUP).
MATMUL_DTYPE = jnp.bfloat16

# Weight slab row layout (all blocks have 4H = 128 lanes):
#   [0,  I)          encoder W_ih^T            (i/f/o cols pre-scaled by 0.5)
#   [I,  I+H)        encoder W_hh^T            (scaled)
#   [I+H, I+2H)      decoder W_hh^T  (step 0)  (scaled)
#   [I+2H, I+3H)     folded decoder W (steps>=1) = W_hh^T + Lw^T @ W_ih^T (scaled)
#   [I+3H, I+4H)     fused output head Lw^T @ Fw^T, padded O -> 128 lanes (unscaled)
W_SLAB_ROWS = INPUT_SIZE + 4 * HIDDEN_SIZE      # 144
# Bias slab rows (f32, 8 x 128): 0=enc bias, 1=dec bias step0, 2=folded dec bias,
# 3=fused output bias (padded to 128 lanes), 4..7 zero padding.
B_SLAB_ROWS = 8


def seq2seq_kernel(
    x_ref,       # (S*Bg, I)        bf16, time-major rows t*Bg + b (group slice)
    st_ref,      # (2*Bg, H)        f32, rows [h0 | c0] (group slice)
    w_ref,       # (144, 128)       bf16 weight slab (shared)
    b_ref,       # (8, 128)         f32 bias slab (shared)
    out_ref,     # (Bg, 128)        f32, lane-dense output slab
    *, seq_len, out_steps, hidden, input_size, batch_g,
):
    S, Bg, H, I = seq_len, batch_g, hidden, input_size
    G = 4 * H
    f32 = jnp.float32
    cdt = w_ref.dtype  # bf16 MXU operand dtype

    # ---- static slab views (tile-aligned row offsets: 16/48/80/112) ----
    w_e_ih = w_ref[0:I, :]                      # (I, 4H)
    w_e_hh = w_ref[I:I + H, :]                  # (H, 4H)
    w_d_hh = w_ref[I + H:I + 2 * H, :]          # (H, 4H)
    w_fold = w_ref[I + 2 * H:I + 3 * H, :]      # (H, 4H)
    w_out = w_ref[I + 3 * H:I + 4 * H, :]       # (H, 128)  padded output head

    e_b = b_ref[0:1, :]                         # (1, 4H)
    d_b0 = b_ref[1:2, :]                        # (1, 4H)
    b_fold = jnp.broadcast_to(b_ref[2:3, :], (Bg, G))   # hoisted (used 3x in loop)
    b_out = b_ref[3:4, :]                       # (1, 128)

    # ---- Encoder: ALL input projections + bias in one matmul, off the serial chain ----
    xg_all = (
        jnp.dot(x_ref[...], w_e_ih, preferred_element_type=f32) + e_b
    )  # (S*Bg, 4H) f32

    def lstm_gates(gates, c):
        # One full-width tanh per step (EUP); i/f/o columns were pre-scaled by
        # 0.5 so sigmoid(z) == 0.5 * tanh(z/2) + 0.5 is rebuilt on the VPU.
        th = jnp.tanh(gates)
        i = 0.5 * th[:, 0 * H:1 * H] + 0.5
        f = 0.5 * th[:, 1 * H:2 * H] + 0.5
        g = th[:, 2 * H:3 * H]
        o = 0.5 * th[:, 3 * H:4 * H] + 0.5
        c_new = f * c + i * g
        h_new = o * jnp.tanh(c_new)
        return h_new, c_new

    h = st_ref[0:Bg, :]        # (Bg, H) f32
    c = st_ref[Bg:2 * Bg, :]   # (Bg, H) f32
    for t in range(S):
        gates = xg_all[t * Bg:(t + 1) * Bg, :] + jnp.dot(
            h.astype(cdt), w_e_hh, preferred_element_type=f32)
        h, c = lstm_gates(gates, c)

    # ---- Decoder step 0: input is all-zeros -> gates = h @ W_hh^T + b ----
    gates = jnp.dot(h.astype(cdt), w_d_hh, preferred_element_type=f32) + d_b0
    h, c = lstm_gates(gates, c)
    h_sum = h

    # ---- Decoder steps 1..out_steps-1: feedback Linear folded into one matmul ----
    for _ in range(out_steps - 1):
        gates = jnp.dot(h.astype(cdt), w_fold, preferred_element_type=f32) + b_fold
        h, c = lstm_gates(gates, c)
        h_sum = h_sum + h

    # ---- sum(pred) -> decoder Linear -> final Linear -> sigmoid, one matmul ----
    logits = jnp.dot(h_sum.astype(cdt), w_out, preferred_element_type=f32) + b_out
    out_ref[...] = jax.nn.sigmoid(logits)       # (Bg, 128) lane-dense store


def seq2seq_fusion(x, params, h0, c0, *, num_groups=1):
    """x: (B, S, I) f32; h0/c0: (B, H) f32.  Returns (B, output_size) f32."""
    B, S, I = x.shape
    H, O = HIDDEN_SIZE, OUTPUT_SIZE
    # Rows per group: multiple of 8 (f32 sublane fill).  No batch size is baked
    # into the parameters, so any packed batch works.
    Bg = ((-(-B // num_groups)) + 7) // 8 * 8
    Bp = Bg * num_groups
    pad = Bp - B

    xp = jnp.pad(x, ((0, pad), (0, 0), (0, 0)))
    h0p = jnp.pad(h0, ((0, pad), (0, 0)))
    c0p = jnp.pad(c0, ((0, pad), (0, 0)))

    # Layout plumbing outside the kernel: time-major per-group flatten so the
    # hoisted encoder projection is one dense (S*Bg, I) matmul per group.
    x_tm = xp.transpose(1, 0, 2)                                     # (S, Bp, I)
    x_g = (x_tm.reshape(S, num_groups, Bg, I)
                .transpose(1, 0, 2, 3)
                .reshape(num_groups, S * Bg, I)
                .astype(MATMUL_DTYPE))                               # (G, S*Bg, I) bf16
    # State slab per group: rows [h0 | c0], sublane-aligned slices in-kernel.
    st = jnp.concatenate(
        [h0p.reshape(num_groups, Bg, H), c0p.reshape(num_groups, Bg, H)],
        axis=1)                                                      # (G, 2*Bg, H) f32

    kern = functools.partial(
        seq2seq_kernel, seq_len=S, out_steps=O, hidden=H, input_size=I, batch_g=Bg)

    out_p = pl.pallas_call(
        kern,
        out_shape=jax.ShapeDtypeStruct((Bp, 128), jnp.float32),
        grid=(num_groups,),
        in_specs=[
            pl.BlockSpec((None, S * Bg, I), lambda g: (g, 0, 0)),    # x (per group)
            pl.BlockSpec((None, 2 * Bg, H), lambda g: (g, 0, 0)),    # [h0|c0] (per group)
            pl.BlockSpec((W_SLAB_ROWS, 128), lambda g: (0, 0)),      # weight slab (shared)
            pl.BlockSpec((B_SLAB_ROWS, 128), lambda g: (0, 0)),      # bias slab (shared)
        ],
        out_specs=pl.BlockSpec((Bg, 128), lambda g: (g, 0)),
        compiler_params=pltpu.CompilerParams(
            dimension_semantics=("parallel",)),                      # v7x: 2 TCs; 1-TC chips: no-op
    )(x_g, st, params["w_slab"], params["b_slab"])
    return out_p[:B, :O]


# ----------------------------- parameters ------------------------------------


def init_raw_params(key):
    """PyTorch-layout parameters with PyTorch default init scales."""
    H, I, O = HIDDEN_SIZE, INPUT_SIZE, OUTPUT_SIZE
    ks = jax.random.split(key, 12)
    su = 1.0 / float(H) ** 0.5   # nn.LSTM default
    sl = 1.0 / float(H) ** 0.5   # Decoder Linear: fan_in = H
    sf = 1.0 / float(I) ** 0.5   # Final Linear:   fan_in = I

    def u(k, shape, s):
        return jax.random.uniform(k, shape, jnp.float32, -s, s)

    return dict(
        e_wih=u(ks[0], (4 * H, I), su), e_whh=u(ks[1], (4 * H, H), su),
        e_bih=u(ks[2], (4 * H,), su), e_bhh=u(ks[3], (4 * H,), su),
        d_wih=u(ks[4], (4 * H, I), su), d_whh=u(ks[5], (4 * H, H), su),
        d_bih=u(ks[6], (4 * H,), su), d_bhh=u(ks[7], (4 * H,), su),
        d_lw=u(ks[8], (I, H), sl), d_lb=u(ks[9], (I,), sl),
        f_w=u(ks[10], (O, I), sf), f_b=u(ks[11], (O,), sf),
    )


def make_initial_state(key, batch):
    """Deterministic replacement for the Encoder's per-forward torch.randn h0/c0."""
    kh, kc = jax.random.split(key)
    h0 = jax.random.normal(kh, (batch, HIDDEN_SIZE), jnp.float32)
    c0 = jax.random.normal(kc, (batch, HIDDEN_SIZE), jnp.float32)
    return h0, c0


def fold_params(raw, matmul_dtype=MATMUL_DTYPE):
    """Transpose, fold, pre-scale i/f/o gate columns by 0.5, pack into 2 slabs."""
    H, I, O = HIDDEN_SIZE, INPUT_SIZE, OUTPUT_SIZE
    e_wih_t = raw["e_wih"].T                              # (I, 4H)
    e_whh_t = raw["e_whh"].T                              # (H, 4H)
    e_b = (raw["e_bih"] + raw["e_bhh"]).reshape(1, 4 * H)
    d_wih_t = raw["d_wih"].T                              # (I, 4H)
    d_whh_t = raw["d_whh"].T                              # (H, 4H)
    d_b = (raw["d_bih"] + raw["d_bhh"]).reshape(1, 4 * H)
    d_lw_t = raw["d_lw"].T                                # (H, I)
    d_lb = raw["d_lb"].reshape(1, I)
    f_w_t = raw["f_w"].T                                  # (I, O)
    f_b = raw["f_b"].reshape(1, O)

    # Decoder feedback fold (steps t >= 1; step 0 uses d_whh/d_b directly).
    w_fold = d_whh_t + d_lw_t @ d_wih_t                   # (H, 4H)
    b_fold = d_b + d_lb @ d_wih_t                         # (1, 4H)
    # sum(pred) -> decoder Linear -> final Linear fused into one (H, O) matrix.
    m_out = d_lw_t @ f_w_t                                # (H, O)
    b_out = float(O) * (d_lb @ f_w_t) + f_b               # (1, O)

    # 0.5 pre-scale on i/f/o columns (exact in bf16) -> single tanh per step.
    gate_scale = jnp.concatenate([
        jnp.full((H,), 0.5, jnp.float32),   # i
        jnp.full((H,), 0.5, jnp.float32),   # f
        jnp.ones((H,), jnp.float32),        # g
        jnp.full((H,), 0.5, jnp.float32),   # o
    ])

    # Pad the output head to 128 lanes for an unmasked lane-dense store.
    m_out_p = jnp.zeros((H, 128), jnp.float32).at[:, :O].set(m_out)
    b_out_p = jnp.zeros((1, 128), jnp.float32).at[:, :O].set(b_out)

    w_slab = jnp.concatenate([
        e_wih_t * gate_scale,     # (I, 128)
        e_whh_t * gate_scale,     # (H, 128)
        d_whh_t * gate_scale,     # (H, 128)
        w_fold * gate_scale,      # (H, 128)
        m_out_p,                  # (H, 128)
    ], axis=0).astype(matmul_dtype)                       # (144, 128) bf16

    b_slab = jnp.zeros((B_SLAB_ROWS, 128), jnp.float32)
    b_slab = b_slab.at[0:1, :].set(e_b * gate_scale)
    b_slab = b_slab.at[1:2, :].set(d_b * gate_scale)
    b_slab = b_slab.at[2:3, :].set(b_fold * gate_scale)
    b_slab = b_slab.at[3:4, :].set(b_out_p)

    return dict(w_slab=w_slab, b_slab=b_slab)


# ----------------------------- references ------------------------------------


def _lstm_step_f32(x_t, h, c, w_ih_t, w_hh_t, b):
    H = h.shape[-1]
    gates = jnp.dot(x_t, w_ih_t) + jnp.dot(h, w_hh_t) + b
    i = jax.nn.sigmoid(gates[:, 0 * H:1 * H])
    f = jax.nn.sigmoid(gates[:, 1 * H:2 * H])
    g = jnp.tanh(gates[:, 2 * H:3 * H])
    o = jax.nn.sigmoid(gates[:, 3 * H:4 * H])
    c_new = f * c + i * g
    return o * jnp.tanh(c_new), c_new


def seq2seq_fusion_ref_f32(x, raw, h0, c0):
    """Pure-JAX f32 reference mirroring the original PyTorch forward pass."""
    B, S, I = x.shape
    H = HIDDEN_SIZE
    e_wih_t, e_whh_t = raw["e_wih"].T, raw["e_whh"].T
    e_b = (raw["e_bih"] + raw["e_bhh"]).reshape(1, 4 * H)
    d_wih_t, d_whh_t = raw["d_wih"].T, raw["d_whh"].T
    d_b = (raw["d_bih"] + raw["d_bhh"]).reshape(1, 4 * H)
    d_lw_t, d_lb = raw["d_lw"].T, raw["d_lb"].reshape(1, I)
    f_w_t, f_b = raw["f_w"].T, raw["f_b"].reshape(1, OUTPUT_SIZE)

    h, c = h0, c0
    for t in range(S):
        h, c = _lstm_step_f32(x[:, t, :], h, c, e_wih_t, e_whh_t, e_b)
    inp = jnp.zeros((B, I), jnp.float32)
    acc = jnp.zeros((B, I), jnp.float32)
    for _ in range(OUTPUT_SIZE):
        h, c = _lstm_step_f32(inp, h, c, d_wih_t, d_whh_t, d_b)
        pred = jnp.dot(h, d_lw_t) + d_lb
        acc = acc + pred
        inp = pred
    return jax.nn.sigmoid(jnp.dot(acc, f_w_t) + f_b)


def seq2seq_fusion_ref_folded(x, params, h0, c0):
    """Pure-JAX mirror of the kernel's folded / scaled / bf16 math."""
    B, S, I = x.shape
    H, O = HIDDEN_SIZE, OUTPUT_SIZE
    w, bsl = params["w_slab"], params["b_slab"]
    w_e_ih = w[0:I]
    w_e_hh = w[I:I + H]
    w_d_hh = w[I + H:I + 2 * H]
    w_fold = w[I + 2 * H:I + 3 * H]
    w_out = w[I + 3 * H:I + 4 * H]
    e_b, d_b0, b_fold, b_out = bsl[0:1], bsl[1:2], bsl[2:3], bsl[3:4]
    cdt = w.dtype
    x_tm = x.transpose(1, 0, 2).astype(cdt)   # (S, B, I)

    def gate_update(gates, c):
        th = jnp.tanh(gates)
        i = 0.5 * th[:, 0 * H:1 * H] + 0.5
        f = 0.5 * th[:, 1 * H:2 * H] + 0.5
        g = th[:, 2 * H:3 * H]
        o = 0.5 * th[:, 3 * H:4 * H] + 0.5
        c_new = f * c + i * g
        return o * jnp.tanh(c_new), c_new

    h, c = h0, c0
    for t in range(S):
        gates = (jnp.dot(x_tm[t], w_e_ih, preferred_element_type=jnp.float32) + e_b
                 + jnp.dot(h.astype(cdt), w_e_hh, preferred_element_type=jnp.float32))
        h, c = gate_update(gates, c)
    gates = jnp.dot(h.astype(cdt), w_d_hh, preferred_element_type=jnp.float32) + d_b0
    h, c = gate_update(gates, c)
    h_sum = h
    for _ in range(O - 1):
        gates = jnp.dot(h.astype(cdt), w_fold, preferred_element_type=jnp.float32) + b_fold
        h, c = gate_update(gates, c)
        h_sum = h_sum + h
    logits = jnp.dot(h_sum.astype(cdt), w_out, preferred_element_type=jnp.float32) + b_out
    return jax.nn.sigmoid(logits)[:, :O]


if __name__ == "__main__":
    key = jax.random.PRNGKey(0)
    kx, kparams, kstate, kbig = jax.random.split(key, 4)

    raw = init_raw_params(kparams)
    params = fold_params(raw)

    # --- small case matching the module's natural shapes (B=2, S=8, I=16) ---
    x = jax.random.normal(kx, (BATCH, SEQ_LEN, INPUT_SIZE), jnp.float32)
    h0, c0 = make_initial_state(kstate, BATCH)

    out = jax.block_until_ready(seq2seq_fusion(x, params, h0, c0, num_groups=1))
    assert out.shape == (BATCH, OUTPUT_SIZE)

    # Tight check against a pure-JAX mirror of the kernel's folded bf16 math.
    mirrored = seq2seq_fusion_ref_folded(x, params, h0, c0)
    assert jnp.allclose(out, mirrored, atol=2e-3, rtol=2e-3), (out, mirrored)

    # Semantic check against the f32 PyTorch-style forward (loose tolerance:
    # bf16 matmul operands compound through 12 recurrent steps).
    ref = seq2seq_fusion_ref_f32(x, raw, h0, c0)
    assert jnp.allclose(out, ref, atol=5e-2, rtol=5e-2), (out, ref)

    # --- packed-batch case: 64 sequences, 2 parallel groups (fills sublanes;
    #     on v7x the two groups land on the two TensorCores) ---
    kbx, kbs = jax.random.split(kbig)
    B_big = 64
    x_big = jax.random.normal(kbx, (B_big, SEQ_LEN, INPUT_SIZE), jnp.float32)
    h0b, c0b = make_initial_state(kbs, B_big)
    out_big = jax.block_until_ready(
        seq2seq_fusion(x_big, params, h0b, c0b, num_groups=2))
    assert out_big.shape == (B_big, OUTPUT_SIZE)
    mirrored_big = seq2seq_fusion_ref_folded(x_big, params, h0b, c0b)
    assert jnp.allclose(out_big, mirrored_big, atol=2e-3, rtol=2e-3), (
        out_big, mirrored_big)

    print("KERNEL_OK")
</pallas_src>

<mosaic_0001>
module attributes {stable_mosaic.version = 11 : i64} {
  func.func @seq2seq_kernel(%arg0: i32, %arg1: memref<1x64x16xbf16, #tpu.memory_space<vmem>>, %arg2: memref<1x16x32xf32, #tpu.memory_space<vmem>>, %arg3: memref<144x128xbf16, #tpu.memory_space<vmem>>, %arg4: memref<8x128xf32, #tpu.memory_space<vmem>>, %arg5: memref<8x128xf32, #tpu.memory_space<vmem>>) attributes {dimension_semantics = [#tpu.dimension_semantics<parallel>], iteration_bounds = array<i64: 1>, scalar_prefetch = 0 : i64, scratch_operands = 0 : i64, tpu.core_type = #tpu.core_type<tc>, window_params = [{transform_indices = @transform_0, window_bounds = array<i64: 1, 64, 16>}, {transform_indices = @transform_1, window_bounds = array<i64: 1, 16, 32>}, {pipeline_mode = #tpu.pipeline_mode<synchronous>, transform_indices = @transform_2, window_bounds = array<i64: 144, 128>}, {pipeline_mode = #tpu.pipeline_mode<synchronous>, transform_indices = @transform_3, window_bounds = array<i64: 8, 128>}, {transform_indices = @transform_4, window_bounds = array<i64: 8, 128>}]} {
    %c0 = arith.constant 0 : index
    %c0_0 = arith.constant 0 : index
    %0 = vector.load %arg3[%c0, %c0_0] : memref<144x128xbf16, #tpu.memory_space<vmem>>, vector<16x128xbf16>
    %c16 = arith.constant 16 : index
    %c0_1 = arith.constant 0 : index
    %1 = vector.load %arg3[%c16, %c0_1] : memref<144x128xbf16, #tpu.memory_space<vmem>>, vector<32x128xbf16>
    %c48 = arith.constant 48 : index
    %c0_2 = arith.constant 0 : index
    %2 = vector.load %arg3[%c48, %c0_2] : memref<144x128xbf16, #tpu.memory_space<vmem>>, vector<32x128xbf16>
    %c80 = arith.constant 80 : index
    %c0_3 = arith.constant 0 : index
    %3 = vector.load %arg3[%c80, %c0_3] : memref<144x128xbf16, #tpu.memory_space<vmem>>, vector<32x128xbf16>
    %c112 = arith.constant 112 : index
    %c0_4 = arith.constant 0 : index
    %4 = vector.load %arg3[%c112, %c0_4] : memref<144x128xbf16, #tpu.memory_space<vmem>>, vector<32x128xbf16>
    %c0_5 = arith.constant 0 : index
    %c0_6 = arith.constant 0 : index
    %5 = vector.load %arg4[%c0_5, %c0_6] : memref<8x128xf32, #tpu.memory_space<vmem>>, vector<1x128xf32>
    %c1 = arith.constant 1 : index
    %c0_7 = arith.constant 0 : index
    %6 = vector.load %arg4[%c1, %c0_7] : memref<8x128xf32, #tpu.memory_space<vmem>>, vector<1x128xf32>
    %c2 = arith.constant 2 : index
    %c0_8 = arith.constant 0 : index
    %7 = vector.load %arg4[%c2, %c0_8] : memref<8x128xf32, #tpu.memory_space<vmem>>, vector<1x128xf32>
    %8 = vector.shape_cast %7 : vector<1x128xf32> to vector<1x128xf32>
    %9 = vector.broadcast %8 : vector<1x128xf32> to vector<8x128xf32>
    %c3 = arith.constant 3 : index
    %c0_9 = arith.constant 0 : index
    %10 = vector.load %arg4[%c3, %c0_9] : memref<8x128xf32, #tpu.memory_space<vmem>>, vector<1x128xf32>
    %c0_10 = arith.constant 0 : index
    %c0_11 = arith.constant 0 : index
    %c0_12 = arith.constant 0 : index
    %11 = vector.load %arg1[%c0_10, %c0_11, %c0_12] : memref<1x64x16xbf16, #tpu.memory_space<vmem>>, vector<1x64x16xbf16>
    %12 = vector.shape_cast %11 : vector<1x64x16xbf16> to vector<64x16xbf16>
    %cst = arith.constant dense<0.000000e+00> : vector<64x128xf32>
    %13 = tpu.matmul %12, %0, %cst {dimension_numbers = #tpu.dot_dimension_numbers<[1], [0], [0], [1], [0, 0, 1, 1], [], []>} : vector<64x16xbf16>, vector<16x128xbf16>, vector<64x128xf32> -> vector<64x128xf32>
    %14 = vector.broadcast %5 : vector<1x128xf32> to vector<64x128xf32>
    %15 = arith.addf %13, %14 : vector<64x128xf32>
    %c0_13 = arith.constant 0 : index
    %c0_14 = arith.constant 0 : index
    %c0_15 = arith.constant 0 : index
    %16 = vector.load %arg2[%c0_13, %c0_14, %c0_15] : memref<1x16x32xf32, #tpu.memory_space<vmem>>, vector<1x8x32xf32>
    %17 = vector.shape_cast %16 : vector<1x8x32xf32> to vector<8x32xf32>
    %c0_16 = arith.constant 0 : index
    %c8 = arith.constant 8 : index
    %c0_17 = arith.constant 0 : index
    %18 = vector.load %arg2[%c0_16, %c8, %c0_17] : memref<1x16x32xf32, #tpu.memory_space<vmem>>, vector<1x8x32xf32>
    %19 = vector.shape_cast %18 : vector<1x8x32xf32> to vector<8x32xf32>
    %20 = vector.extract_strided_slice %15 {offsets = [0, 0], sizes = [8, 128], strides = [1, 1]} : vector<64x128xf32> to vector<8x128xf32>
    %21 = arith.truncf %17 : vector<8x32xf32> to vector<8x32xbf16>
    %cst_18 = arith.constant dense<0.000000e+00> : vector<8x128xf32>
    %22 = tpu.matmul %21, %1, %cst_18 {dimension_numbers = #tpu.dot_dimension_numbers<[1], [0], [0], [1], [0, 0, 1, 1], [], []>} : vector<8x32xbf16>, vector<32x128xbf16>, vector<8x128xf32> -> vector<8x128xf32>
    %23 = arith.addf %20, %22 : vector<8x128xf32>
    %24 = math.tanh %23 : vector<8x128xf32>
    %25 = vector.extract_strided_slice %24 {offsets = [0, 0], sizes = [8, 32], strides = [1, 1]} : vector<8x128xf32> to vector<8x32xf32>
    %cst_19 = arith.constant 5.000000e-01 : f32
    %26 = vector.broadcast %cst_19 : f32 to vector<8x32xf32>
    %27 = arith.mulf %26, %25 : vector<8x32xf32>
    %cst_20 = arith.constant 5.000000e-01 : f32
    %28 = vector.broadcast %cst_20 : f32 to vector<8x32xf32>
    %29 = arith.addf %27, %28 : vector<8x32xf32>
    %30 = vector.extract_strided_slice %24 {offsets = [0, 32], sizes = [8, 32], strides = [1, 1]} : vector<8x128xf32> to vector<8x32xf32>
    %cst_21 = arith.constant 5.000000e-01 : f32
    %31 = vector.broadcast %cst_21 : f32 to vector<8x32xf32>
    %32 = arith.mulf %31, %30 : vector<8x32xf32>
    %cst_22 = arith.constant 5.000000e-01 : f32
    %33 = vector.broadcast %cst_22 : f32 to vector<8x32xf32>
    %34 = arith.addf %32, %33 : vector<8x32xf32>
    %35 = vector.extract_strided_slice %24 {offsets = [0, 64], sizes = [8, 32], strides = [1, 1]} : vector<8x128xf32> to vector<8x32xf32>
    %36 = vector.extract_strided_slice %24 {offsets = [0, 96], sizes = [8, 32], strides = [1, 1]} : vector<8x128xf32> to vector<8x32xf32>
    %cst_23 = arith.constant 5.000000e-01 : f32
    %37 = vector.broadcast %cst_23 : f32 to vector<8x32xf32>
    %38 = arith.mulf %37, %36 : vector<8x32xf32>
    %cst_24 = arith.constant 5.000000e-01 : f32
    %39 = vector.broadcast %cst_24 : f32 to vector<8x32xf32>
    %40 = arith.addf %38, %39 : vector<8x32xf32>
    %41 = arith.mulf %34, %19 : vector<8x32xf32>
    %42 = arith.mulf %29, %35 : vector<8x32xf32>
    %43 = arith.addf %41, %42 : vector<8x32xf32>
    %44 = math.tanh %43 : vector<8x32xf32>
    %45 = arith.mulf %40, %44 : vector<8x32xf32>
    %46 = vector.extract_strided_slice %15 {offsets = [8, 0], sizes = [8, 128], strides = [1, 1]} : vector<64x128xf32> to vector<8x128xf32>
    %47 = arith.truncf %45 : vector<8x32xf32> to vector<8x32xbf16>
    %cst_25 = arith.constant dense<0.000000e+00> : vector<8x128xf32>
    %48 = tpu.matmul %47, %1, %cst_25 {dimension_numbers = #tpu.dot_dimension_numbers<[1], [0], [0], [1], [0, 0, 1, 1], [], []>} : vector<8x32xbf16>, vector<32x128xbf16>, vector<8x128xf32> -> vector<8x128xf32>
    %49 = arith.addf %46, %48 : vector<8x128xf32>
    %50 = math.tanh %49 : vector<8x128xf32>
    %51 = vector.extract_strided_slice %50 {offsets = [0, 0], sizes = [8, 32], strides = [1, 1]} : vector<8x128xf32> to vector<8x32xf32>
    %cst_26 = arith.constant 5.000000e-01 : f32
    %52 = vector.broadcast %cst_26 : f32 to vector<8x32xf32>
    %53 = arith.mulf %52, %51 : vector<8x32xf32>
    %cst_27 = arith.constant 5.000000e-01 : f32
    %54 = vector.broadcast %cst_27 : f32 to vector<8x32xf32>
    %55 = arith.addf %53, %54 : vector<8x32xf32>
    %56 = vector.extract_strided_slice %50 {offsets = [0, 32], sizes = [8, 32], strides = [1, 1]} : vector<8x128xf32> to vector<8x32xf32>
    %cst_28 = arith.constant 5.000000e-01 : f32
    %57 = vector.broadcast %cst_28 : f32 to vector<8x32xf32>
    %58 = arith.mulf %57, %56 : vector<8x32xf32>
    %cst_29 = arith.constant 5.000000e-01 : f32
    %59 = vector.broadcast %cst_29 : f32 to vector<8x32xf32>
    %60 = arith.addf %58, %59 : vector<8x32xf32>
    %61 = vector.extract_strided_slice %50 {offsets = [0, 64], sizes = [8, 32], strides = [1, 1]} : vector<8x128xf32> to vector<8x32xf32>
    %62 = vector.extract_strided_slice %50 {offsets = [0, 96], sizes = [8, 32], strides = [1, 1]} : vector<8x128xf32> to vector<8x32xf32>
    %cst_30 = arith.constant 5.000000e-01 : f32
    %63 = vector.broadcast %cst_30 : f32 to vector<8x32xf32>
    %64 = arith.mulf %63, %62 : vector<8x32xf32>
    %cst_31 = arith.constant 5.000000e-01 : f32
    %65 = vector.broadcast %cst_31 : f32 to vector<8x32xf32>
    %66 = arith.addf %64, %65 : vector<8x32xf32>
    %67 = arith.mulf %60, %43 : vector<8x32xf32>
    %68 = arith.mulf %55, %61 : vector<8x32xf32>
    %69 = arith.addf %67, %68 : vector<8x32xf32>
    %70 = math.tanh %69 : vector<8x32xf32>
    %71 = arith.mulf %66, %70 : vector<8x32xf32>
    %72 = vector.extract_strided_slice %15 {offsets = [16, 0], sizes = [8, 128], strides = [1, 1]} : vector<64x128xf32> to vector<8x128xf32>
    %73 = arith.truncf %71 : vector<8x32xf32> to vector<8x32xbf16>
    %cst_32 = arith.constant dense<0.000000e+00> : vector<8x128xf32>
    %74 = tpu.matmul %73, %1, %cst_32 {dimension_numbers = #tpu.dot_dimension_numbers<[1], [0], [0], [1], [0, 0, 1, 1], [], []>} : vector<8x32xbf16>, vector<32x128xbf16>, vector<8x128xf32> -> vector<8x128xf32>
    %75 = arith.addf %72, %74 : vector<8x128xf32>
    %76 = math.tanh %75 : vector<8x128xf32>
    %77 = vector.extract_strided_slice %76 {offsets = [0, 0], sizes = [8, 32], strides = [1, 1]} : vector<8x128xf32> to vector<8x32xf32>
    %cst_33 = arith.constant 5.000000e-01 : f32
    %78 = vector.broadcast %cst_33 : f32 to vector<8x32xf32>
    %79 = arith.mulf %78, %77 : vector<8x32xf32>
    %cst_34 = arith.constant 5.000000e-01 : f32
    %80 = vector.broadcast %cst_34 : f32 to vector<8x32xf32>
    %81 = arith.addf %79, %80 : vector<8x32xf32>
    %82 = vector.extract_strided_slice %76 {offsets = [0, 32], sizes = [8, 32], strides = [1, 1]} : vector<8x128xf32> to vector<8x32xf32>
    %cst_35 = arith.constant 5.000000e-01 : f32
    %83 = vector.broadcast %cst_35 : f32 to vector<8x32xf32>
    %84 = arith.mulf %83, %82 : vector<8x32xf32>
    %cst_36 = arith.constant 5.000000e-01 : f32
    %85 = vector.broadcast %cst_36 : f32 to vector<8x32xf32>
    %86 = arith.addf %84, %85 : vector<8x32xf32>
    %87 = vector.extract_strided_slice %76 {offsets = [0, 64], sizes = [8, 32], strides = [1, 1]} : vector<8x128xf32> to vector<8x32xf32>
    %88 = vector.extract_strided_slice %76 {offsets = [0, 96], sizes = [8, 32], strides = [1, 1]} : vector<8x128xf32> to vector<8x32xf32>
    %cst_37 = arith.constant 5.000000e-01 : f32
    %89 = vector.broadcast %cst_37 : f32 to vector<8x32xf32>
    %90 = arith.mulf %89, %88 : vector<8x32xf32>
    %cst_38 = arith.constant 5.000000e-01 : f32
    %91 = vector.broadcast %cst_38 : f32 to vector<8x32xf32>
    %92 = arith.addf %90, %91 : vector<8x32xf32>
    %93 = arith.mulf %86, %69 : vector<8x32xf32>
    %94 = arith.mulf %81, %87 : vector<8x32xf32>
    %95 = arith.addf %93, %94 : vector<8x32xf32>
    %96 = math.tanh %95 : vector<8x32xf32>
    %97 = arith.mulf %92, %96 : vector<8x32xf32>
    %98 = vector.extract_strided_slice %15 {offsets = [24, 0], sizes = [8, 128], strides = [1, 1]} : vector<64x128xf32> to vector<8x128xf32>
    %99 = arith.truncf %97 : vector<8x32xf32> to vector<8x32xbf16>
    %cst_39 = arith.constant dense<0.000000e+00> : vector<8x128xf32>
    %100 = tpu.matmul %99, %1, %cst_39 {dimension_numbers = #tpu.dot_dimension_numbers<[1], [0], [0], [1], [0, 0, 1, 1], [], []>} : vector<8x32xbf16>, vector<32x128xbf16>, vector<8x128xf32> -> vector<8x128xf32>
    %101 = arith.addf %98, %100 : vector<8x128xf32>
    %102 = math.tanh %101 : vector<8x128xf32>
    %103 = vector.extract_strided_slice %102 {offsets = [0, 0], sizes = [8, 32], strides = [1, 1]} : vector<8x128xf32> to vector<8x32xf32>
    %cst_40 = arith.constant 5.000000e-01 : f32
    %104 = vector.broadcast %cst_40 : f32 to vector<8x32xf32>
    %105 = arith.mulf %104, %103 : vector<8x32xf32>
    %cst_41 = arith.constant 5.000000e-01 : f32
    %106 = vector.broadcast %cst_41 : f32 to vector<8x32xf32>
    %107 = arith.addf %105, %106 : vector<8x32xf32>
    %108 = vector.extract_strided_slice %102 {offsets = [0, 32], sizes = [8, 32], strides = [1, 1]} : vector<8x128xf32> to vector<8x32xf32>
    %cst_42 = arith.constant 5.000000e-01 : f32
    %109 = vector.broadcast %cst_42 : f32 to vector<8x32xf32>
    %110 = arith.mulf %109, %108 : vector<8x32xf32>
    %cst_43 = arith.constant 5.000000e-01 : f32
    %111 = vector.broadcast %cst_43 : f32 to vector<8x32xf32>
    %112 = arith.addf %110, %111 : vector<8x32xf32>
    %113 = vector.extract_strided_slice %102 {offsets = [0, 64], sizes = [8, 32], strides = [1, 1]} : vector<8x128xf32> to vector<8x32xf32>
    %114 = vector.extract_strided_slice %102 {offsets = [0, 96], sizes = [8, 32], strides = [1, 1]} : vector<8x128xf32> to vector<8x32xf32>
    %cst_44 = arith.constant 5.000000e-01 : f32
    %115 = vector.broadcast %cst_44 : f32 to vector<8x32xf32>
    %116 = arith.mulf %115, %114 : vector<8x32xf32>
    %cst_45 = arith.constant 5.000000e-01 : f32
    %117 = vector.broadcast %cst_45 : f32 to vector<8x32xf32>
    %118 = arith.addf %116, %117 : vector<8x32xf32>
    %119 = arith.mulf %112, %95 : vector<8x32xf32>
    %120 = arith.mulf %107, %113 : vector<8x32xf32>
    %121 = arith.addf %119, %120 : vector<8x32xf32>
    %122 = math.tanh %121 : vector<8x32xf32>
    %123 = arith.mulf %118, %122 : vector<8x32xf32>
    %124 = vector.extract_strided_slice %15 {offsets = [32, 0], sizes = [8, 128], strides = [1, 1]} : vector<64x128xf32> to vector<8x128xf32>
    %125 = arith.truncf %123 : vector<8x32xf32> to vector<8x32xbf16>
    %cst_46 = arith.constant dense<0.000000e+00> : vector<8x128xf32>
    %126 = tpu.matmul %125, %1, %cst_46 {dimension_numbers = #tpu.dot_dimension_numbers<[1], [0], [0], [1], [0, 0, 1, 1], [], []>} : vector<8x32xbf16>, vector<32x128xbf16>, vector<8x128xf32> -> vector<8x128xf32>
    %127 = arith.addf %124, %126 : vector<8x128xf32>
    %128 = math.tanh %127 : vector<8x128xf32>
    %129 = vector.extract_strided_slice %128 {offsets = [0, 0], sizes = [8, 32], strides = [1, 1]} : vector<8x128xf32> to vector<8x32xf32>
    %cst_47 = arith.constant 5.000000e-01 : f32
    %130 = vector.broadcast %cst_47 : f32 to vector<8x32xf32>
    %131 = arith.mulf %130, %129 : vector<8x32xf32>
    %cst_48 = arith.constant 5.000000e-01 : f32
    %132 = vector.broadcast %cst_48 : f32 to vector<8x32xf32>
    %133 = arith.addf %131, %132 : vector<8x32xf32>
    %134 = vector.extract_strided_slice %128 {offsets = [0, 32], sizes = [8, 32], strides = [1, 1]} : vector<8x128xf32> to vector<8x32xf32>
    %cst_49 = arith.constant 5.000000e-01 : f32
    %135 = vector.broadcast %cst_49 : f32 to vector<8x32xf32>
    %136 = arith.mulf %135, %134 : vector<8x32xf32>
    %cst_50 = arith.constant 5.000000e-01 : f32
    %137 = vector.broadcast %cst_50 : f32 to vector<8x32xf32>
    %138 = arith.addf %136, %137 : vector<8x32xf32>
    %139 = vector.extract_strided_slice %128 {offsets = [0, 64], sizes = [8, 32], strides = [1, 1]} : vector<8x128xf32> to vector<8x32xf32>
    %140 = vector.extract_strided_slice %128 {offsets = [0, 96], sizes = [8, 32], strides = [1, 1]} : vector<8x128xf32> to vector<8x32xf32>
    %cst_51 = arith.constant 5.000000e-01 : f32
    %141 = vector.broadcast %cst_51 : f32 to vector<8x32xf32>
    %142 = arith.mulf %141, %140 : vector<8x32xf32>
    %cst_52 = arith.constant 5.000000e-01 : f32
    %143 = vector.broadcast %cst_52 : f32 to vector<8x32xf32>
    %144 = arith.addf %142, %143 : vector<8x32xf32>
    %145 = arith.mulf %138, %121 : vector<8x32xf32>
    %146 = arith.mulf %133, %139 : vector<8x32xf32>
    %147 = arith.addf %145, %146 : vector<8x32xf32>
    %148 = math.tanh %147 : vector<8x32xf32>
    %149 = arith.mulf %144, %148 : vector<8x32xf32>
    %150 = vector.extract_strided_slice %15 {offsets = [40, 0], sizes = [8, 128], strides = [1, 1]} : vector<64x128xf32> to vector<8x128xf32>
    %151 = arith.truncf %149 : vector<8x32xf32> to vector<8x32xbf16>
    %cst_53 = arith.constant dense<0.000000e+00> : vector<8x128xf32>
    %152 = tpu.matmul %151, %1, %cst_53 {dimension_numbers = #tpu.dot_dimension_numbers<[1], [0], [0], [1], [0, 0, 1, 1], [], []>} : vector<8x32xbf16>, vector<32x128xbf16>, vector<8x128xf32> -> vector<8x128xf32>
    %153 = arith.addf %150, %152 : vector<8x128xf32>
    %154 = math.tanh %153 : vector<8x128xf32>
    %155 = vector.extract_strided_slice %154 {offsets = [0, 0], sizes = [8, 32], strides = [1, 1]} : vector<8x128xf32> to vector<8x32xf32>
    %cst_54 = arith.constant 5.000000e-01 : f32
    %156 = vector.broadcast %cst_54 : f32 to vector<8x32xf32>
    %157 = arith.mulf %156, %155 : vector<8x32xf32>
    %cst_55 = arith.constant 5.000000e-01 : f32
    %158 = vector.broadcast %cst_55 : f32 to vector<8x32xf32>
    %159 = arith.addf %157, %158 : vector<8x32xf32>
    %160 = vector.extract_strided_slice %154 {offsets = [0, 32], sizes = [8, 32], strides = [1, 1]} : vector<8x128xf32> to vector<8x32xf32>
    %cst_56 = arith.constant 5.000000e-01 : f32
    %161 = vector.broadcast %cst_56 : f32 to vector<8x32xf32>
    %162 = arith.mulf %161, %160 : vector<8x32xf32>
    %cst_57 = arith.constant 5.000000e-01 : f32
    %163 = vector.broadcast %cst_57 : f32 to vector<8x32xf32>
    %164 = arith.addf %162, %163 : vector<8x32xf32>
    %165 = vector.extract_strided_slice %154 {offsets = [0, 64], sizes = [8, 32], strides = [1, 1]} : vector<8x128xf32> to vector<8x32xf32>
    %166 = vector.extract_strided_slice %154 {offsets = [0, 96], sizes = [8, 32], strides = [1, 1]} : vector<8x128xf32> to vector<8x32xf32>
    %cst_58 = arith.constant 5.000000e-01 : f32
    %167 = vector.broadcast %cst_58 : f32 to vector<8x32xf32>
    %168 = arith.mulf %167, %166 : vector<8x32xf32>
    %cst_59 = arith.constant 5.000000e-01 : f32
    %169 = vector.broadcast %cst_59 : f32 to vector<8x32xf32>
    %170 = arith.addf %168, %169 : vector<8x32xf32>
    %171 = arith.mulf %164, %147 : vector<8x32xf32>
    %172 = arith.mulf %159, %165 : vector<8x32xf32>
    %173 = arith.addf %171, %172 : vector<8x32xf32>
    %174 = math.tanh %173 : vector<8x32xf32>
    %175 = arith.mulf %170, %174 : vector<8x32xf32>
    %176 = vector.extract_strided_slice %15 {offsets = [48, 0], sizes = [8, 128], strides = [1, 1]} : vector<64x128xf32> to vector<8x128xf32>
    %177 = arith.truncf %175 : vector<8x32xf32> to vector<8x32xbf16>
    %cst_60 = arith.constant dense<0.000000e+00> : vector<8x128xf32>
    %178 = tpu.matmul %177, %1, %cst_60 {dimension_numbers = #tpu.dot_dimension_numbers<[1], [0], [0], [1], [0, 0, 1, 1], [], []>} : vector<8x32xbf16>, vector<32x128xbf16>, vector<8x128xf32> -> vector<8x128xf32>
    %179 = arith.addf %176, %178 : vector<8x128xf32>
    %180 = math.tanh %179 : vector<8x128xf32>
    %181 = vector.extract_strided_slice %180 {offsets = [0, 0], sizes = [8, 32], strides = [1, 1]} : vector<8x128xf32> to vector<8x32xf32>
    %cst_61 = arith.constant 5.000000e-01 : f32
    %182 = vector.broadcast %cst_61 : f32 to vector<8x32xf32>
    %183 = arith.mulf %182, %181 : vector<8x32xf32>
    %cst_62 = arith.constant 5.000000e-01 : f32
    %184 = vector.broadcast %cst_62 : f32 to vector<8x32xf32>
    %185 = arith.addf %183, %184 : vector<8x32xf32>
    %186 = vector.extract_strided_slice %180 {offsets = [0, 32], sizes = [8, 32], strides = [1, 1]} : vector<8x128xf32> to vector<8x32xf32>
    %cst_63 = arith.constant 5.000000e-01 : f32
    %187 = vector.broadcast %cst_63 : f32 to vector<8x32xf32>
    %188 = arith.mulf %187, %186 : vector<8x32xf32>
    %cst_64 = arith.constant 5.000000e-01 : f32
    %189 = vector.broadcast %cst_64 : f32 to vector<8x32xf32>
    %190 = arith.addf %188, %189 : vector<8x32xf32>
    %191 = vector.extract_strided_slice %180 {offsets = [0, 64], sizes = [8, 32], strides = [1, 1]} : vector<8x128xf32> to vector<8x32xf32>
    %192 = vector.extract_strided_slice %180 {offsets = [0, 96], sizes = [8, 32], strides = [1, 1]} : vector<8x128xf32> to vector<8x32xf32>
    %cst_65 = arith.constant 5.000000e-01 : f32
    %193 = vector.broadcast %cst_65 : f32 to vector<8x32xf32>
    %194 = arith.mulf %193, %192 : vector<8x32xf32>
    %cst_66 = arith.constant 5.000000e-01 : f32
    %195 = vector.broadcast %cst_66 : f32 to vector<8x32xf32>
    %196 = arith.addf %194, %195 : vector<8x32xf32>
    %197 = arith.mulf %190, %173 : vector<8x32xf32>
    %198 = arith.mulf %185, %191 : vector<8x32xf32>
    %199 = arith.addf %197, %198 : vector<8x32xf32>
    %200 = math.tanh %199 : vector<8x32xf32>
    %201 = arith.mulf %196, %200 : vector<8x32xf32>
    %202 = vector.extract_strided_slice %15 {offsets = [56, 0], sizes = [8, 128], strides = [1, 1]} : vector<64x128xf32> to vector<8x128xf32>
    %203 = arith.truncf %201 : vector<8x32xf32> to vector<8x32xbf16>
    %cst_67 = arith.constant dense<0.000000e+00> : vector<8x128xf32>
    %204 = tpu.matmul %203, %1, %cst_67 {dimension_numbers = #tpu.dot_dimension_numbers<[1], [0], [0], [1], [0, 0, 1, 1], [], []>} : vector<8x32xbf16>, vector<32x128xbf16>, vector<8x128xf32> -> vector<8x128xf32>
    %205 = arith.addf %202, %204 : vector<8x128xf32>
    %206 = math.tanh %205 : vector<8x128xf32>
    %207 = vector.extract_strided_slice %206 {offsets = [0, 0], sizes = [8, 32], strides = [1, 1]} : vector<8x128xf32> to vector<8x32xf32>
    %cst_68 = arith.constant 5.000000e-01 : f32
    %208 = vector.broadcast %cst_68 : f32 to vector<8x32xf32>
    %209 = arith.mulf %208, %207 : vector<8x32xf32>
    %cst_69 = arith.constant 5.000000e-01 : f32
    %210 = vector.broadcast %cst_69 : f32 to vector<8x32xf32>
    %211 = arith.addf %209, %210 : vector<8x32xf32>
    %212 = vector.extract_strided_slice %206 {offsets = [0, 32], sizes = [8, 32], strides = [1, 1]} : vector<8x128xf32> to vector<8x32xf32>
    %cst_70 = arith.constant 5.000000e-01 : f32
    %213 = vector.broadcast %cst_70 : f32 to vector<8x32xf32>
    %214 = arith.mulf %213, %212 : vector<8x32xf32>
    %cst_71 = arith.constant 5.000000e-01 : f32
    %215 = vector.broadcast %cst_71 : f32 to vector<8x32xf32>
    %216 = arith.addf %214, %215 : vector<8x32xf32>
    %217 = vector.extract_strided_slice %206 {offsets = [0, 64], sizes = [8, 32], strides = [1, 1]} : vector<8x128xf32> to vector<8x32xf32>
    %218 = vector.extract_strided_slice %206 {offsets = [0, 96], sizes = [8, 32], strides = [1, 1]} : vector<8x128xf32> to vector<8x32xf32>
    %cst_72 = arith.constant 5.000000e-01 : f32
    %219 = vector.broadcast %cst_72 : f32 to vector<8x32xf32>
    %220 = arith.mulf %219, %218 : vector<8x32xf32>
    %cst_73 = arith.constant 5.000000e-01 : f32
    %221 = vector.broadcast %cst_73 : f32 to vector<8x32xf32>
    %222 = arith.addf %220, %221 : vector<8x32xf32>
    %223 = arith.mulf %216, %199 : vector<8x32xf32>
    %224 = arith.mulf %211, %217 : vector<8x32xf32>
    %225 = arith.addf %223, %224 : vector<8x32xf32>
    %226 = math.tanh %225 : vector<8x32xf32>
    %227 = arith.mulf %222, %226 : vector<8x32xf32>
    %228 = arith.truncf %227 : vector<8x32xf32> to vector<8x32xbf16>
    %cst_74 = arith.constant dense<0.000000e+00> : vector<8x128xf32>
    %229 = tpu.matmul %228, %2, %cst_74 {dimension_numbers = #tpu.dot_dimension_numbers<[1], [0], [0], [1], [0, 0, 1, 1], [], []>} : vector<8x32xbf16>, vector<32x128xbf16>, vector<8x128xf32> -> vector<8x128xf32>
    %230 = vector.broadcast %6 : vector<1x128xf32> to vector<8x128xf32>
    %231 = arith.addf %229, %230 : vector<8x128xf32>
    %232 = math.tanh %231 : vector<8x128xf32>
    %233 = vector.extract_strided_slice %232 {offsets = [0, 0], sizes = [8, 32], strides = [1, 1]} : vector<8x128xf32> to vector<8x32xf32>
    %cst_75 = arith.constant 5.000000e-01 : f32
    %234 = vector.broadcast %cst_75 : f32 to vector<8x32xf32>
    %235 = arith.mulf %234, %233 : vector<8x32xf32>
    %cst_76 = arith.constant 5.000000e-01 : f32
    %236 = vector.broadcast %cst_76 : f32 to vector<8x32xf32>
    %237 = arith.addf %235, %236 : vector<8x32xf32>
    %238 = vector.extract_strided_slice %232 {offsets = [0, 32], sizes = [8, 32], strides = [1, 1]} : vector<8x128xf32> to vector<8x32xf32>
    %cst_77 = arith.constant 5.000000e-01 : f32
    %239 = vector.broadcast %cst_77 : f32 to vector<8x32xf32>
    %240 = arith.mulf %239, %238 : vector<8x32xf32>
    %cst_78 = arith.constant 5.000000e-01 : f32
    %241 = vector.broadcast %cst_78 : f32 to vector<8x32xf32>
    %242 = arith.addf %240, %241 : vector<8x32xf32>
    %243 = vector.extract_strided_slice %232 {offsets = [0, 64], sizes = [8, 32], strides = [1, 1]} : vector<8x128xf32> to vector<8x32xf32>
    %244 = vector.extract_strided_slice %232 {offsets = [0, 96], sizes = [8, 32], strides = [1, 1]} : vector<8x128xf32> to vector<8x32xf32>
    %cst_79 = arith.constant 5.000000e-01 : f32
    %245 = vector.broadcast %cst_79 : f32 to vector<8x32xf32>
    %246 = arith.mulf %245, %244 : vector<8x32xf32>
    %cst_80 = arith.constant 5.000000e-01 : f32
    %247 = vector.broadcast %cst_80 : f32 to vector<8x32xf32>
    %248 = arith.addf %246, %247 : vector<8x32xf32>
    %249 = arith.mulf %242, %225 : vector<8x32xf32>
    %250 = arith.mulf %237, %243 : vector<8x32xf32>
    %251 = arith.addf %249, %250 : vector<8x32xf32>
    %252 = math.tanh %251 : vector<8x32xf32>
    %253 = arith.mulf %248, %252 : vector<8x32xf32>
    %254 = arith.truncf %253 : vector<8x32xf32> to vector<8x32xbf16>
    %cst_81 = arith.constant dense<0.000000e+00> : vector<8x128xf32>
    %255 = tpu.matmul %254, %3, %cst_81 {dimension_numbers = #tpu.dot_dimension_numbers<[1], [0], [0], [1], [0, 0, 1, 1], [], []>} : vector<8x32xbf16>, vector<32x128xbf16>, vector<8x128xf32> -> vector<8x128xf32>
    %256 = arith.addf %255, %9 : vector<8x128xf32>
    %257 = math.tanh %256 : vector<8x128xf32>
    %258 = vector.extract_strided_slice %257 {offsets = [0, 0], sizes = [8, 32], strides = [1, 1]} : vector<8x128xf32> to vector<8x32xf32>
    %cst_82 = arith.constant 5.000000e-01 : f32
    %259 = vector.broadcast %cst_82 : f32 to vector<8x32xf32>
    %260 = arith.mulf %259, %258 : vector<8x32xf32>
    %cst_83 = arith.constant 5.000000e-01 : f32
    %261 = vector.broadcast %cst_83 : f32 to vector<8x32xf32>
    %262 = arith.addf %260, %261 : vector<8x32xf32>
    %263 = vector.extract_strided_slice %257 {offsets = [0, 32], sizes = [8, 32], strides = [1, 1]} : vector<8x128xf32> to vector<8x32xf32>
    %cst_84 = arith.constant 5.000000e-01 : f32
    %264 = vector.broadcast %cst_84 : f32 to vector<8x32xf32>
    %265 = arith.mulf %264, %263 : vector<8x32xf32>
    %cst_85 = arith.constant 5.000000e-01 : f32
    %266 = vector.broadcast %cst_85 : f32 to vector<8x32xf32>
    %267 = arith.addf %265, %266 : vector<8x32xf32>
    %268 = vector.extract_strided_slice %257 {offsets = [0, 64], sizes = [8, 32], strides = [1, 1]} : vector<8x128xf32> to vector<8x32xf32>
    %269 = vector.extract_strided_slice %257 {offsets = [0, 96], sizes = [8, 32], strides = [1, 1]} : vector<8x128xf32> to vector<8x32xf32>
    %cst_86 = arith.constant 5.000000e-01 : f32
    %270 = vector.broadcast %cst_86 : f32 to vector<8x32xf32>
    %271 = arith.mulf %270, %269 : vector<8x32xf32>
    %cst_87 = arith.constant 5.000000e-01 : f32
    %272 = vector.broadcast %cst_87 : f32 to vector<8x32xf32>
    %273 = arith.addf %271, %272 : vector<8x32xf32>
    %274 = arith.mulf %267, %251 : vector<8x32xf32>
    %275 = arith.mulf %262, %268 : vector<8x32xf32>
    %276 = arith.addf %274, %275 : vector<8x32xf32>
    %277 = math.tanh %276 : vector<8x32xf32>
    %278 = arith.mulf %273, %277 : vector<8x32xf32>
    %279 = arith.addf %253, %278 : vector<8x32xf32>
    %280 = arith.truncf %278 : vector<8x32xf32> to vector<8x32xbf16>
    %cst_88 = arith.constant dense<0.000000e+00> : vector<8x128xf32>
    %281 = tpu.matmul %280, %3, %cst_88 {dimension_numbers = #tpu.dot_dimension_numbers<[1], [0], [0], [1], [0, 0, 1, 1], [], []>} : vector<8x32xbf16>, vector<32x128xbf16>, vector<8x128xf32> -> vector<8x128xf32>
    %282 = arith.addf %281, %9 : vector<8x128xf32>
    %283 = math.tanh %282 : vector<8x128xf32>
    %284 = vector.extract_strided_slice %283 {offsets = [0, 0], sizes = [8, 32], strides = [1, 1]} : vector<8x128xf32> to vector<8x32xf32>
    %cst_89 = arith.constant 5.000000e-01 : f32
    %285 = vector.broadcast %cst_89 : f32 to vector<8x32xf32>
    %286 = arith.mulf %285, %284 : vector<8x32xf32>
    %cst_90 = arith.constant 5.000000e-01 : f32
    %287 = vector.broadcast %cst_90 : f32 to vector<8x32xf32>
    %288 = arith.addf %286, %287 : vector<8x32xf32>
    %289 = vector.extract_strided_slice %283 {offsets = [0, 32], sizes = [8, 32], strides = [1, 1]} : vector<8x128xf32> to vector<8x32xf32>
    %cst_91 = arith.constant 5.000000e-01 : f32
    %290 = vector.broadcast %cst_91 : f32 to vector<8x32xf32>
    %291 = arith.mulf %290, %289 : vector<8x32xf32>
    %cst_92 = arith.constant 5.000000e-01 : f32
    %292 = vector.broadcast %cst_92 : f32 to vector<8x32xf32>
    %293 = arith.addf %291, %292 : vector<8x32xf32>
    %294 = vector.extract_strided_slice %283 {offsets = [0, 64], sizes = [8, 32], strides = [1, 1]} : vector<8x128xf32> to vector<8x32xf32>
    %295 = vector.extract_strided_slice %283 {offsets = [0, 96], sizes = [8, 32], strides = [1, 1]} : vector<8x128xf32> to vector<8x32xf32>
    %cst_93 = arith.constant 5.000000e-01 : f32
    %296 = vector.broadcast %cst_93 : f32 to vector<8x32xf32>
    %297 = arith.mulf %296, %295 : vector<8x32xf32>
    %cst_94 = arith.constant 5.000000e-01 : f32
    %298 = vector.broadcast %cst_94 : f32 to vector<8x32xf32>
    %299 = arith.addf %297, %298 : vector<8x32xf32>
    %300 = arith.mulf %293, %276 : vector<8x32xf32>
    %301 = arith.mulf %288, %294 : vector<8x32xf32>
    %302 = arith.addf %300, %301 : vector<8x32xf32>
    %303 = math.tanh %302 : vector<8x32xf32>
    %304 = arith.mulf %299, %303 : vector<8x32xf32>
    %305 = arith.addf %279, %304 : vector<8x32xf32>
    %306 = arith.truncf %304 : vector<8x32xf32> to vector<8x32xbf16>
    %cst_95 = arith.constant dense<0.000000e+00> : vector<8x128xf32>
    %307 = tpu.matmul %306, %3, %cst_95 {dimension_numbers = #tpu.dot_dimension_numbers<[1], [0], [0], [1], [0, 0, 1, 1], [], []>} : vector<8x32xbf16>, vector<32x128xbf16>, vector<8x128xf32> -> vector<8x128xf32>
    %308 = arith.addf %307, %9 : vector<8x128xf32>
    %309 = math.tanh %308 : vector<8x128xf32>
    %310 = vector.extract_strided_slice %309 {offsets = [0, 0], sizes = [8, 32], strides = [1, 1]} : vector<8x128xf32> to vector<8x32xf32>
    %cst_96 = arith.constant 5.000000e-01 : f32
    %311 = vector.broadcast %cst_96 : f32 to vector<8x32xf32>
    %312 = arith.mulf %311, %310 : vector<8x32xf32>
    %cst_97 = arith.constant 5.000000e-01 : f32
    %313 = vector.broadcast %cst_97 : f32 to vector<8x32xf32>
    %314 = arith.addf %312, %313 : vector<8x32xf32>
    %315 = vector.extract_strided_slice %309 {offsets = [0, 32], sizes = [8, 32], strides = [1, 1]} : vector<8x128xf32> to vector<8x32xf32>
    %cst_98 = arith.constant 5.000000e-01 : f32
    %316 = vector.broadcast %cst_98 : f32 to vector<8x32xf32>
    %317 = arith.mulf %316, %315 : vector<8x32xf32>
    %cst_99 = arith.constant 5.000000e-01 : f32
    %318 = vector.broadcast %cst_99 : f32 to vector<8x32xf32>
    %319 = arith.addf %317, %318 : vector<8x32xf32>
    %320 = vector.extract_strided_slice %309 {offsets = [0, 64], sizes = [8, 32], strides = [1, 1]} : vector<8x128xf32> to vector<8x32xf32>
    %321 = vector.extract_strided_slice %309 {offsets = [0, 96], sizes = [8, 32], strides = [1, 1]} : vector<8x128xf32> to vector<8x32xf32>
    %cst_100 = arith.constant 5.000000e-01 : f32
    %322 = vector.broadcast %cst_100 : f32 to vector<8x32xf32>
    %323 = arith.mulf %322, %321 : vector<8x32xf32>
    %cst_101 = arith.constant 5.000000e-01 : f32
    %324 = vector.broadcast %cst_101 : f32 to vector<8x32xf32>
    %325 = arith.addf %323, %324 : vector<8x32xf32>
    %326 = arith.mulf %319, %302 : vector<8x32xf32>
    %327 = arith.mulf %314, %320 : vector<8x32xf32>
    %328 = arith.addf %326, %327 : vector<8x32xf32>
    %329 = math.tanh %328 : vector<8x32xf32>
    %330 = arith.mulf %325, %329 : vector<8x32xf32>
    %331 = arith.addf %305, %330 : vector<8x32xf32>
    %332 = arith.truncf %331 : vector<8x32xf32> to vector<8x32xbf16>
    %cst_102 = arith.constant dense<0.000000e+00> : vector<8x128xf32>
    %333 = tpu.matmul %332, %4, %cst_102 {dimension_numbers = #tpu.dot_dimension_numbers<[1], [0], [0], [1], [0, 0, 1, 1], [], []>} : vector<8x32xbf16>, vector<32x128xbf16>, vector<8x128xf32> -> vector<8x128xf32>
    %334 = vector.broadcast %10 : vector<1x128xf32> to vector<8x128xf32>
    %335 = arith.addf %333, %334 : vector<8x128xf32>
    %336 = arith.negf %335 : vector<8x128xf32>
    %337 = math.exp %336 : vector<8x128xf32>
    %cst_103 = arith.constant 1.000000e+00 : f32
    %338 = vector.broadcast %cst_103 : f32 to vector<8x128xf32>
    %339 = arith.addf %338, %337 : vector<8x128xf32>
    %340 = arith.divf %338, %339 : vector<8x128xf32>
    %c0_104 = arith.constant 0 : index
    %c0_105 = arith.constant 0 : index
    %341 = vector.load %arg5[%c0_104, %c0_105] : memref<8x128xf32, #tpu.memory_space<vmem>>, vector<8x128xf32>
    tpu.vector_store %arg5[%c0_104, %c0_105], %340 {strides = array<i32>} : memref<8x128xf32, #tpu.memory_space<vmem>>, vector<8x128xf32>,
    return
  }
  func.func @transform_0(%arg0: i32) -> (i32, i32, i32) {
    %c0_i32 = arith.constant 0 : i32
    %c0_i32_0 = arith.constant 0 : i32
    %c0_i32_1 = arith.constant 0 : i32
    return %arg0, %c0_i32, %c0_i32_0 : i32, i32, i32
  }
  func.func @transform_1(%arg0: i32) -> (i32, i32, i32) {
    %c0_i32 = arith.constant 0 : i32
    %c0_i32_0 = arith.constant 0 : i32
    %c0_i32_1 = arith.constant 0 : i32
    return %arg0, %c0_i32, %c0_i32_0 : i32, i32, i32
  }
  func.func @transform_2(%arg0: i32) -> (i32, i32) {
    %c0_i32 = arith.constant 0 : i32
    %c0_i32_0 = arith.constant 0 : i32
    %c0_i32_1 = arith.constant 0 : i32
    return %c0_i32, %c0_i32_0 : i32, i32
  }
  func.func @transform_3(%arg0: i32) -> (i32, i32) {
    %c0_i32 = arith.constant 0 : i32
    %c0_i32_0 = arith.constant 0 : i32
    %c0_i32_1 = arith.constant 0 : i32
    return %c0_i32, %c0_i32_0 : i32, i32
  }
  func.func @transform_4(%arg0: i32) -> (i32, i32) {
    %c0_i32 = arith.constant 0 : i32
    %c0_i32_0 = arith.constant 0 : i32
    return %arg0, %c0_i32 : i32, i32
  }
}

</mosaic_0001>

<llo_original>
// kernel: tpu_custom_call.1
$region0: #{tpu_custom_call.1}
  #allocation0 [shape = 'u32[]', space=smem, size = 0x4, offset = 0x4, fixed_abs, tag = 'smem constant byte address 0x4 - core index']
  #allocation1 [shape = 'u32[144,128]{1,0:T(1,128)}', space=vmem, size = 0x12000, scoped, tag = 'internal scratch']
  %s0 = inlined_call_operand.vmem [shape: bf16[1,64,16], index: 0, kind: input, shape index: {}]
  %s1 = inlined_call_operand.vmem [shape: f32[1,16,32], index: 1, kind: input, shape index: {}]
  %s2 = inlined_call_operand.hbm [shape: bf16[144,128], index: 2, kind: input, shape index: {}]
  %s3 = inlined_call_operand.vmem [shape: f32[8,128], index: 3, kind: input, shape index: {}]
  %s4 = inlined_call_operand.hbm [shape: f32[8,128], index: 4, kind: output, shape index: {}]
  %s5 = sld [smem:[#allocation0]]
  $region30: #{tpu_custom_call.1} parent=0
    _
  %s7 = ssub.s32 1, %s5
  %s8 = scalar_select 0, %s7, %s5
  $region1: #{tpu_custom_call.1} parent=0
    #allocation2 [shape = 'u8[36864]{0}', space=vmem, size = 0x9000, scoped, tag = 'input window, operand 2, single buffered']
    #allocation3 [shape = 's32[1]{0}', space=sflag, size = 0x4, scoped, tag = 'scoped memory for tpu_custom_call.1']
    #allocation4 [shape = 's32[1]{0}', space=sflag, size = 0x4, scoped, tag = 'scoped memory for tpu_custom_call.1']
    #allocation5 [shape = 'u8[4096]{0}', space=vmem, size = 0x1000, scoped, tag = 'output window, operand 0, single buffered']
    %9 = vsyncpa [#allocation3], 0
    %10 = vsyncpa [#allocation4], 0
    // Predicated region
    $region2: #{tpu_custom_call.1} parent=1 // pred_check
      _
    $region3: #{tpu_custom_call.1} parent=1 // pred_check_branch
      %12 = sbr.rel (0) target = $region5
    $region4: #{tpu_custom_call.1} parent=1 // pred_region
      _
    $region5: #{tpu_custom_call.1} parent=1 // pred_fallthru
      _
    // Predicated region
    $region6: #{tpu_custom_call.1} parent=1 // pred_check
      _
    $region7: #{tpu_custom_call.1} parent=1 // pred_check_branch
      %14 = sbr.rel (0) target = $region9
    $region8: #{tpu_custom_call.1} parent=1 // pred_region
      _
    $region9: #{tpu_custom_call.1} parent=1 // pred_fallthru
      _
    // Predicated region
    $region10: #{tpu_custom_call.1} parent=1 // pred_check
      _
    $region11: #{tpu_custom_call.1} parent=1 // pred_check_branch
      %16 = sbr.rel (0) target = $region13
    $region12: #{tpu_custom_call.1} parent=1 // pred_region
      %s18 = ssub.s32 1152, 1152
      %19 = vsyncadd [#allocation3], %s18
      %s20 = sshll.u32 [#allocation2], 4
      %s21 = int_to_ptr.vmem [resolvable:$true] %s20
      %26 = dma.hbm_to_vmem [thread:$0]  %s2, 1152, %s21, [#allocation3], 64, 64, 4
    $region13: #{tpu_custom_call.1} parent=1 // pred_fallthru
      _
    // Predicated region
    $region14: #{tpu_custom_call.1} parent=1 // pred_check
      _
    $region15: #{tpu_custom_call.1} parent=1 // pred_check_branch
      %28 = sbr.rel (0) target = $region17
    $region16: #{tpu_custom_call.1} parent=1 // pred_region
      _
    $region17: #{tpu_custom_call.1} parent=1 // pred_fallthru
      _
    // Predicated region
    $region18: #{tpu_custom_call.1} parent=1 // pred_check
      _
    $region19: #{tpu_custom_call.1} parent=1 // pred_check_branch
      %30 = sbr.rel (0) target = $region21
    $region20: #{tpu_custom_call.1} parent=1 // pred_region
      %31 = dma.done [#allocation3], 1152
    $region21: #{tpu_custom_call.1} parent=1 // pred_fallthru
      _
    %v33 = vld [vmem:[#allocation2] sm:$0xf]
    %v34 = vld [vmem:[#allocation2 + $0x4] sm:$0xf]
    %v35 = vld [vmem:[#allocation2 + $0x8] sm:$0xf]
    %v36 = vld [vmem:[#allocation2 + $0xc] sm:$0xf]
    %v37 = vld [vmem:[#allocation2 + $0x10] sm:$0xf]
    %v38 = vld [vmem:[#allocation2 + $0x14] sm:$0xf]
    %v39 = vld [vmem:[#allocation2 + $0x18] sm:$0xf]
    %v40 = vld [vmem:[#allocation2 + $0x1c] sm:$0xf]
    %v41 = vld [vmem:[#allocation2 + $0x20] sm:$0xf]
    %v42 = vld [vmem:[#allocation2 + $0x24] sm:$0xf]
    %v43 = vld [vmem:[#allocation2 + $0x28] sm:$0xf]
    %v44 = vld [vmem:[#allocation2 + $0x2c] sm:$0xf]
    %v45 = vld [vmem:[#allocation2 + $0x30] sm:$0xf]
    %v46 = vld [vmem:[#allocation2 + $0x34] sm:$0xf]
    %v47 = vld [vmem:[#allocation2 + $0x38] sm:$0xf]
    %v48 = vld [vmem:[#allocation2 + $0x3c] sm:$0xf]
    %v49 = vld [vmem:[#allocation2 + $0x40] sm:$0xf]
    %v50 = vld [vmem:[#allocation2 + $0x44] sm:$0xf]
    %v51 = vld [vmem:[%s3] sm:$0x1]
    %v52 = vld [vmem:[%s3 + $0x1] sm:$0x1]
    %v53 = vld [vmem:[%s3 + $0x2] sm:$0x1]
    %v54 = vlaneseq
    %v55 = vshrl.u32 %v54, 7
    %v56 = vsub.s32 0, %v55
    %v57 = vrot.slane %v53, %v56
    %v58 = vld [vmem:[%s3 + $0x3] sm:$0x1]
    %v59 = vld [vmem:[%s0] sm:$0xf]
    %v60 = vld [vmem:[%s0 + $0x4] sm:$0xf]
    %v61 = vld [vmem:[%s0 + $0x8] sm:$0xf]
    %v62 = vld [vmem:[%s0 + $0xc] sm:$0xf]
    %v63 = vld [vmem:[%s0 + $0x10] sm:$0xf]
    %v64 = vld [vmem:[%s0 + $0x14] sm:$0xf]
    %v65 = vld [vmem:[%s0 + $0x18] sm:$0xf]
    %v66 = vld [vmem:[%s0 + $0x1c] sm:$0xf]
    %v67 = vlaneseq
    %v68 = vshrl.u32 %v67, 7
    %v69 = vsub.s32 0, %v68
    %v70 = vrot.slane %v51, %v69
    %v79 = vunpack.c.l.b16 %v59
    %v80 = vunpack.c.l.b16 %v60
    %v81 = vunpack.c.l.b16 %v61
    %v82 = vunpack.c.l.b16 %v62
    %v83 = vunpack.c.l.b16 %v63
    %v84 = vunpack.c.l.b16 %v64
    %v85 = vunpack.c.l.b16 %v65
    %v86 = vunpack.c.l.b16 %v66
    %v87 = vpack.c.b16 %v80, %v79
    %v88 = vpack.c.b16 %v82, %v81
    %v89 = vpack.c.b16 %v84, %v83
    %v90 = vpack.c.b16 %v86, %v85
    %v93 = vunpack.c.l.b16 %v33
    %v94 = vunpack.c.l.b16 %v34
    %v95 = vpack.c.b16 %v94, %v93
    %vm97 = vcmask 130048
    %v99 = vsel %vm97, %v87, 0
    %v102 = vsel %vm97, %v88, 0
    %v105 = vsel %vm97, %v89, 0
    %v108 = vsel %vm97, %v90, 0
    %110 = vmatprep.subr.bf16.mxu0 0
    %111 = vmatpush1.bf16.msra.mxu0 0
    %112 = vmatprep.subr.bf16.mxu0 0
    %113 = vmatpush1.bf16.msra.mxu0 0
    %114 = vmatprep.subr.bf16.mxu0 0
    %115 = vmatpush1.bf16.msra.mxu0 0
    %116 = vmatprep.subr.bf16.mxu0 0
    %117 = vmatpush1.bf16.msra.mxu0 0
    %118 = vmatprep.subr.bf16.mxu0 0
    %119 = vmatpush1.bf16.msra.mxu0 0
    %120 = vmatprep.subr.bf16.mxu0 0
    %121 = vmatpush1.bf16.msra.mxu0 0
    %122 = vmatprep.subr.bf16.mxu0 0
    %123 = vmatpush1.bf16.msra.mxu0 0
    %124 = vmatprep.subr.bf16.mxu0 0
    %125 = vmatpush1.bf16.msra.mxu0 %v95
    %126 = vmatprep.subr.bf16.mxu0 0
    %127 = vmatpush2.bf16.msra.mxu0 0
    %128 = vmatprep.subr.bf16.mxu0 0
    %129 = vmatpush2.bf16.msra.mxu0 0
    %130 = vmatprep.subr.bf16.mxu0 0
    %131 = vmatpush2.bf16.msra.mxu0 0
    %132 = vmatprep.subr.bf16.mxu0 0
    %133 = vmatpush2.bf16.msra.mxu0 0
    %134 = vmatprep.subr.bf16.mxu0 0
    %135 = vmatpush2.bf16.msra.mxu0 0
    %136 = vmatprep.subr.bf16.mxu0 0
    %137 = vmatpush2.bf16.msra.mxu0 0
    %138 = vmatprep.subr.bf16.mxu0 0
    %139 = vmatpush2.bf16.msra.mxu0 0
    %140 = vmatprep.subr.bf16.mxu0 0
    %141 = vmatpush2.bf16.msra.mxu0 0
    %142 = vmatprep.mubr.bf16.mxu0 0
    %143 = vmatmul.mubr.bf16.gmra.mxu0 %v99
    %v144 = vpop.f32.mrf.mxu0
    %v145 = vadd.f32 %v70, %v144
    %v146 = vpop.f32.mrf.mxu0
    %v147 = vpop.f32.mrf.mxu0
    %v148 = vadd.f32 %v70, %v147
    %v149 = vpop.f32.mrf.mxu0
    %150 = vmatprep.mubr.bf16.mxu0 0
    %151 = vmatmul.mubr.bf16.gmra.mxu0 %v102
    %v152 = vpop.f32.mrf.mxu0
    %v153 = vadd.f32 %v70, %v152
    %v154 = vpop.f32.mrf.mxu0
    %v155 = vpop.f32.mrf.mxu0
    %v156 = vadd.f32 %v70, %v155
    %v157 = vpop.f32.mrf.mxu0
    %158 = vmatprep.mubr.bf16.mxu0 0
    %159 = vmatmul.mubr.bf16.gmra.mxu0 %v105
    %v160 = vpop.f32.mrf.mxu0
    %v161 = vadd.f32 %v70, %v160
    %v162 = vpop.f32.mrf.mxu0
    %v163 = vpop.f32.mrf.mxu0
    %v164 = vadd.f32 %v70, %v163
    %v165 = vpop.f32.mrf.mxu0
    %166 = vmatprep.mubr.bf16.mxu0 0
    %167 = vmatmul.mubr.bf16.gmra.mxu0 %v108
    %v168 = vpop.f32.mrf.mxu0
    %v169 = vadd.f32 %v70, %v168
    %v170 = vpop.f32.mrf.mxu0
    %v171 = vpop.f32.mrf.mxu0
    %v172 = vadd.f32 %v70, %v171
    %v173 = vpop.f32.mrf.mxu0
    %174 = vdwg.mxu0
    %v175 = vld [vmem:[%s1] sm:$0xff]
    %v176 = vld [vmem:[%s1 + $0x8] sm:$0xff]
    %v177 = vpack.c.bf16 %v175, %v175
    %v182 = vunpack.c.l.b16 %v35
    %v183 = vunpack.c.l.b16 %v36
    %v184 = vunpack.c.l.b16 %v37
    %v185 = vunpack.c.l.b16 %v38
    %v186 = vpack.c.b16 %v183, %v182
    %v187 = vpack.c.b16 %v185, %v184
    %vm190 = vcmask 261120
    %v192 = vsel %vm190, %v177, 0
    %194 = vmatprep.subr.bf16.mxu0 0
    %195 = vmatpush1.bf16.msra.mxu0 0
    %196 = vmatprep.subr.bf16.mxu0 0
    %197 = vmatpush1.bf16.msra.mxu0 0
    %198 = vmatprep.subr.bf16.mxu0 0
    %199 = vmatpush1.bf16.msra.mxu0 0
    %200 = vmatprep.subr.bf16.mxu0 0
    %201 = vmatpush1.bf16.msra.mxu0 0
    %202 = vmatprep.subr.bf16.mxu0 0
    %203 = vmatpush1.bf16.msra.mxu0 0
    %204 = vmatprep.subr.bf16.mxu0 0
    %205 = vmatpush1.bf16.msra.mxu0 0
    %206 = vmatprep.subr.bf16.mxu0 0
    %207 = vmatpush1.bf16.msra.mxu0 %v187
    %208 = vmatprep.subr.bf16.mxu0 0
    %209 = vmatpush1.bf16.msra.mxu0 %v186
    %210 = vmatprep.subr.bf16.mxu0 0
    %211 = vmatpush2.bf16.msra.mxu0 0
    %212 = vmatprep.subr.bf16.mxu0 0
    %213 = vmatpush2.bf16.msra.mxu0 0
    %214 = vmatprep.subr.bf16.mxu0 0
    %215 = vmatpush2.bf16.msra.mxu0 0
    %216 = vmatprep.subr.bf16.mxu0 0
    %217 = vmatpush2.bf16.msra.mxu0 0
    %218 = vmatprep.subr.bf16.mxu0 0
    %219 = vmatpush2.bf16.msra.mxu0 0
    %220 = vmatprep.subr.bf16.mxu0 0
    %221 = vmatpush2.bf16.msra.mxu0 0
    %222 = vmatprep.subr.bf16.mxu0 0
    %223 = vmatpush2.bf16.msra.mxu0 0
    %224 = vmatprep.subr.bf16.mxu0 0
    %225 = vmatpush2.bf16.msra.mxu0 0
    %226 = vmatprep.mubr.bf16.mxu0 0
    %227 = vmatmul.mubr.bf16.gmra.mxu0 %v192
    %v228 = vpop.f32.mrf.mxu0
    %v229 = vadd.f32 0.0, %v228
    %v230 = vpop.f32.mrf.mxu0
    %v231 = vpop.f32.mrf.mxu0
    %v232 = vpop.f32.mrf.mxu0
    %233 = vdwg.mxu0
    %v234 = vadd.f32 %v145, %v229
    %v235 = vtanh.pop %v234
    %v236 = vmul.f32 %v235, 0.5
    %v237 = vadd.f32 %v236, 0.5
    %239 = vrot.lane.b32.xlu0 %v176, 32
    %v240 = vpop.permute.xlu0 %239
    %v242 = vmul.f32 %v237, %v240
    %244 = vrot.lane.b32.xlu0 %v235, 64
    %v245 = vpop.permute.xlu0 %244
    %v247 = vmul.f32 %v237, %v245
    %249 = vrot.lane.b32.xlu0 %v247, 32
    %v250 = vpop.permute.xlu0 %249
    %v252 = vadd.f32 %v242, %v250
    %v253 = vtanh.pop %v252
    %255 = vrot.lane.b32.xlu0 %v253, 64
    %v256 = vpop.permute.xlu0 %255
    %v258 = vmul.f32 %v237, %v256
    %v259 = vpack.c.bf16 %v258, %v258
    %261 = vrot.lane.b32.xlu0 %v259, 32
    %v262 = vpop.permute.xlu0 %261
    %v264 = vsel %vm190, %v262, 0
    %266 = vmatprep.subr.bf16.mxu0 0
    %267 = vmatpush1.bf16.msra.mxu0 0
    %268 = vmatprep.subr.bf16.mxu0 0
    %269 = vmatpush1.bf16.msra.mxu0 0
    %270 = vmatprep.subr.bf16.mxu0 0
    %271 = vmatpush1.bf16.msra.mxu0 0
    %272 = vmatprep.subr.bf16.mxu0 0
    %273 = vmatpush1.bf16.msra.mxu0 0
    %274 = vmatprep.subr.bf16.mxu0 0
    %275 = vmatpush1.bf16.msra.mxu0 0
    %276 = vmatprep.subr.bf16.mxu0 0
    %277 = vmatpush1.bf16.msra.mxu0 0
    %278 = vmatprep.subr.bf16.mxu0 0
    %279 = vmatpush1.bf16.msra.mxu0 %v187
    %280 = vmatprep.subr.bf16.mxu0 0
    %281 = vmatpush1.bf16.msra.mxu0 %v186
    %282 = vmatprep.subr.bf16.mxu0 0
    %283 = vmatpush2.bf16.msra.mxu0 0
    %284 = vmatprep.subr.bf16.mxu0 0
    %285 = vmatpush2.bf16.msra.mxu0 0
    %286 = vmatprep.subr.bf16.mxu0 0
    %287 = vmatpush2.bf16.msra.mxu0 0
    %288 = vmatprep.subr.bf16.mxu0 0
    %289 = vmatpush2.bf16.msra.mxu0 0
    %290 = vmatprep.subr.bf16.mxu0 0
    %291 = vmatpush2.bf16.msra.mxu0 0
    %292 = vmatprep.subr.bf16.mxu0 0
    %293 = vmatpush2.bf16.msra.mxu0 0
    %294 = vmatprep.subr.bf16.mxu0 0
    %295 = vmatpush2.bf16.msra.mxu0 0
    %296 = vmatprep.subr.bf16.mxu0 0
    %297 = vmatpush2.bf16.msra.mxu0 0
    %298 = vmatprep.mubr.bf16.mxu0 0
    %299 = vmatmul.mubr.bf16.gmra.mxu0 %v264
    %v300 = vpop.f32.mrf.mxu0
    %v301 = vadd.f32 0.0, %v300
    %v302 = vpop.f32.mrf.mxu0
    %v303 = vpop.f32.mrf.mxu0
    %v304 = vpop.f32.mrf.mxu0
    %305 = vdwg.mxu0
    %v306 = vadd.f32 %v148, %v301
    %v307 = vtanh.pop %v306
    %v308 = vmul.f32 %v307, 0.5
    %v309 = vadd.f32 %v308, 0.5
    %v310 = vmul.f32 %v309, %v252
    %312 = vrot.lane.b32.xlu0 %v307, 64
    %v313 = vpop.permute.xlu0 %312
    %v315 = vmul.f32 %v309, %v313
    %317 = vrot.lane.b32.xlu0 %v315, 32
    %v318 = vpop.permute.xlu0 %317
    %v320 = vadd.f32 %v310, %v318
    %v321 = vtanh.pop %v320
    %323 = vrot.lane.b32.xlu0 %v321, 64
    %v324 = vpop.permute.xlu0 %323
    %v326 = vmul.f32 %v309, %v324
    %v327 = vpack.c.bf16 %v326, %v326
    %329 = vrot.lane.b32.xlu0 %v327, 32
    %v330 = vpop.permute.xlu0 %329
    %v332 = vsel %vm190, %v330, 0
    %334 = vmatprep.subr.bf16.mxu0 0
    %335 = vmatpush1.bf16.msra.mxu0 0
    %336 = vmatprep.subr.bf16.mxu0 0
    %337 = vmatpush1.bf16.msra.mxu0 0
    %338 = vmatprep.subr.bf16.mxu0 0
    %339 = vmatpush1.bf16.msra.mxu0 0
    %340 = vmatprep.subr.bf16.mxu0 0
    %341 = vmatpush1.bf16.msra.mxu0 0
    %342 = vmatprep.subr.bf16.mxu0 0
    %343 = vmatpush1.bf16.msra.mxu0 0
    %344 = vmatprep.subr.bf16.mxu0 0
    %345 = vmatpush1.bf16.msra.mxu0 0
    %346 = vmatprep.subr.bf16.mxu0 0
    %347 = vmatpush1.bf16.msra.mxu0 %v187
    %348 = vmatprep.subr.bf16.mxu0 0
    %349 = vmatpush1.bf16.msra.mxu0 %v186
    %350 = vmatprep.subr.bf16.mxu0 0
    %351 = vmatpush2.bf16.msra.mxu0 0
    %352 = vmatprep.subr.bf16.mxu0 0
    %353 = vmatpush2.bf16.msra.mxu0 0
    %354 = vmatprep.subr.bf16.mxu0 0
    %355 = vmatpush2.bf16.msra.mxu0 0
    %356 = vmatprep.subr.bf16.mxu0 0
    %357 = vmatpush2.bf16.msra.mxu0 0
    %358 = vmatprep.subr.bf16.mxu0 0
    %359 = vmatpush2.bf16.msra.mxu0 0
    %360 = vmatprep.subr.bf16.mxu0 0
    %361 = vmatpush2.bf16.msra.mxu0 0
    %362 = vmatprep.subr.bf16.mxu0 0
    %363 = vmatpush2.bf16.msra.mxu0 0
    %364 = vmatprep.subr.bf16.mxu0 0
    %365 = vmatpush2.bf16.msra.mxu0 0
    %366 = vmatprep.mubr.bf16.mxu0 0
    %367 = vmatmul.mubr.bf16.gmra.mxu0 %v332
    %v368 = vpop.f32.mrf.mxu0
    %v369 = vadd.f32 0.0, %v368
    %v370 = vpop.f32.mrf.mxu0
    %v371 = vpop.f32.mrf.mxu0
    %v372 = vpop.f32.mrf.mxu0
    %373 = vdwg.mxu0
    %v374 = vadd.f32 %v153, %v369
    %v375 = vtanh.pop %v374
    %v376 = vmul.f32 %v375, 0.5
    %v377 = vadd.f32 %v376, 0.5
    %v378 = vmul.f32 %v377, %v320
    %380 = vrot.lane.b32.xlu0 %v375, 64
    %v381 = vpop.permute.xlu0 %380
    %v383 = vmul.f32 %v377, %v381
    %385 = vrot.lane.b32.xlu0 %v383, 32
    %v386 = vpop.permute.xlu0 %385
    %v388 = vadd.f32 %v378, %v386
    %v389 = vtanh.pop %v388
    %391 = vrot.lane.b32.xlu0 %v389, 64
    %v392 = vpop.permute.xlu0 %391
    %v394 = vmul.f32 %v377, %v392
    %v395 = vpack.c.bf16 %v394, %v394
    %397 = vrot.lane.b32.xlu0 %v395, 32
    %v398 = vpop.permute.xlu0 %397
    %v400 = vsel %vm190, %v398, 0
    %402 = vmatprep.subr.bf16.mxu0 0
    %403 = vmatpush1.bf16.msra.mxu0 0
    %404 = vmatprep.subr.bf16.mxu0 0
    %405 = vmatpush1.bf16.msra.mxu0 0
    %406 = vmatprep.subr.bf16.mxu0 0
    %407 = vmatpush1.bf16.msra.mxu0 0
    %408 = vmatprep.subr.bf16.mxu0 0
    %409 = vmatpush1.bf16.msra.mxu0 0
    %410 = vmatprep.subr.bf16.mxu0 0
    %411 = vmatpush1.bf16.msra.mxu0 0
    %412 = vmatprep.subr.bf16.mxu0 0
    %413 = vmatpush1.bf16.msra.mxu0 0
    %414 = vmatprep.subr.bf16.mxu0 0
    %415 = vmatpush1.bf16.msra.mxu0 %v187
    %416 = vmatprep.subr.bf16.mxu0 0
    %417 = vmatpush1.bf16.msra.mxu0 %v186
    %418 = vmatprep.subr.bf16.mxu0 0
    %419 = vmatpush2.bf16.msra.mxu0 0
    %420 = vmatprep.subr.bf16.mxu0 0
    %421 = vmatpush2.bf16.msra.mxu0 0
    %422 = vmatprep.subr.bf16.mxu0 0
    %423 = vmatpush2.bf16.msra.mxu0 0
    %424 = vmatprep.subr.bf16.mxu0 0
    %425 = vmatpush2.bf16.msra.mxu0 0
    %426 = vmatprep.subr.bf16.mxu0 0
    %427 = vmatpush2.bf16.msra.mxu0 0
    %428 = vmatprep.subr.bf16.mxu0 0
    %429 = vmatpush2.bf16.msra.mxu0 0
    %430 = vmatprep.subr.bf16.mxu0 0
    %431 = vmatpush2.bf16.msra.mxu0 0
    %432 = vmatprep.subr.bf16.mxu0 0
    %433 = vmatpush2.bf16.msra.mxu0 0
    %434 = vmatprep.mubr.bf16.mxu0 0
    %435 = vmatmul.mubr.bf16.gmra.mxu0 %v400
    %v436 = vpop.f32.mrf.mxu0
    %v437 = vadd.f32 0.0, %v436
    %v438 = vpop.f32.mrf.mxu0
    %v439 = vpop.f32.mrf.mxu0
    %v440 = vpop.f32.mrf.mxu0
    %441 = vdwg.mxu0
    %v442 = vadd.f32 %v156, %v437
    %v443 = vtanh.pop %v442
    %v444 = vmul.f32 %v443, 0.5
    %v445 = vadd.f32 %v444, 0.5
    %v446 = vmul.f32 %v445, %v388
    %448 = vrot.lane.b32.xlu0 %v443, 64
    %v449 = vpop.permute.xlu0 %448
    %v451 = vmul.f32 %v445, %v449
    %453 = vrot.lane.b32.xlu0 %v451, 32
    %v454 = vpop.permute.xlu0 %453
    %v456 = vadd.f32 %v446, %v454
    %v457 = vtanh.pop %v456
    %459 = vrot.lane.b32.xlu0 %v457, 64
    %v460 = vpop.permute.xlu0 %459
    %v462 = vmul.f32 %v445, %v460
    %v463 = vpack.c.bf16 %v462, %v462
    %465 = vrot.lane.b32.xlu0 %v463, 32
    %v466 = vpop.permute.xlu0 %465
    %v468 = vsel %vm190, %v466, 0
    %470 = vmatprep.subr.bf16.mxu0 0
    %471 = vmatpush1.bf16.msra.mxu0 0
    %472 = vmatprep.subr.bf16.mxu0 0
    %473 = vmatpush1.bf16.msra.mxu0 0
    %474 = vmatprep.subr.bf16.mxu0 0
    %475 = vmatpush1.bf16.msra.mxu0 0
    %476 = vmatprep.subr.bf16.mxu0 0
    %477 = vmatpush1.bf16.msra.mxu0 0
    %478 = vmatprep.subr.bf16.mxu0 0
    %479 = vmatpush1.bf16.msra.mxu0 0
    %480 = vmatprep.subr.bf16.mxu0 0
    %481 = vmatpush1.bf16.msra.mxu0 0
    %482 = vmatprep.subr.bf16.mxu0 0
    %483 = vmatpush1.bf16.msra.mxu0 %v187
    %484 = vmatprep.subr.bf16.mxu0 0
    %485 = vmatpush1.bf16.msra.mxu0 %v186
    %486 = vmatprep.subr.bf16.mxu0 0
    %487 = vmatpush2.bf16.msra.mxu0 0
    %488 = vmatprep.subr.bf16.mxu0 0
    %489 = vmatpush2.bf16.msra.mxu0 0
    %490 = vmatprep.subr.bf16.mxu0 0
    %491 = vmatpush2.bf16.msra.mxu0 0
    %492 = vmatprep.subr.bf16.mxu0 0
    %493 = vmatpush2.bf16.msra.mxu0 0
    %494 = vmatprep.subr.bf16.mxu0 0
    %495 = vmatpush2.bf16.msra.mxu0 0
    %496 = vmatprep.subr.bf16.mxu0 0
    %497 = vmatpush2.bf16.msra.mxu0 0
    %498 = vmatprep.subr.bf16.mxu0 0
    %499 = vmatpush2.bf16.msra.mxu0 0
    %500 = vmatprep.subr.bf16.mxu0 0
    %501 = vmatpush2.bf16.msra.mxu0 0
    %502 = vmatprep.mubr.bf16.mxu0 0
    %503 = vmatmul.mubr.bf16.gmra.mxu0 %v468
    %v504 = vpop.f32.mrf.mxu0
    %v505 = vadd.f32 0.0, %v504
    %v506 = vpop.f32.mrf.mxu0
    %v507 = vpop.f32.mrf.mxu0
    %v508 = vpop.f32.mrf.mxu0
    %509 = vdwg.mxu0
    %v510 = vadd.f32 %v161, %v505
    %v511 = vtanh.pop %v510
    %v512 = vmul.f32 %v511, 0.5
    %v513 = vadd.f32 %v512, 0.5
    %v514 = vmul.f32 %v513, %v456
    %516 = vrot.lane.b32.xlu0 %v511, 64
    %v517 = vpop.permute.xlu0 %516
    %v519 = vmul.f32 %v513, %v517
    %521 = vrot.lane.b32.xlu0 %v519, 32
    %v522 = vpop.permute.xlu0 %521
    %v524 = vadd.f32 %v514, %v522
    %v525 = vtanh.pop %v524
    %527 = vrot.lane.b32.xlu0 %v525, 64
    %v528 = vpop.permute.xlu0 %527
    %v530 = vmul.f32 %v513, %v528
    %v531 = vpack.c.bf16 %v530, %v530
    %533 = vrot.lane.b32.xlu0 %v531, 32
    %v534 = vpop.permute.xlu0 %533
    %v536 = vsel %vm190, %v534, 0
    %538 = vmatprep.subr.bf16.mxu0 0
    %539 = vmatpush1.bf16.msra.mxu0 0
    %540 = vmatprep.subr.bf16.mxu0 0
    %541 = vmatpush1.bf16.msra.mxu0 0
    %542 = vmatprep.subr.bf16.mxu0 0
    %543 = vmatpush1.bf16.msra.mxu0 0
    %544 = vmatprep.subr.bf16.mxu0 0
    %545 = vmatpush1.bf16.msra.mxu0 0
    %546 = vmatprep.subr.bf16.mxu0 0
    %547 = vmatpush1.bf16.msra.mxu0 0
    %548 = vmatprep.subr.bf16.mxu0 0
    %549 = vmatpush1.bf16.msra.mxu0 0
    %550 = vmatprep.subr.bf16.mxu0 0
    %551 = vmatpush1.bf16.msra.mxu0 %v187
    %552 = vmatprep.subr.bf16.mxu0 0
    %553 = vmatpush1.bf16.msra.mxu0 %v186
    %554 = vmatprep.subr.bf16.mxu0 0
    %555 = vmatpush2.bf16.msra.mxu0 0
    %556 = vmatprep.subr.bf16.mxu0 0
    %557 = vmatpush2.bf16.msra.mxu0 0
    %558 = vmatprep.subr.bf16.mxu0 0
    %559 = vmatpush2.bf16.msra.mxu0 0
    %560 = vmatprep.subr.bf16.mxu0 0
    %561 = vmatpush2.bf16.msra.mxu0 0
    %562 = vmatprep.subr.bf16.mxu0 0
    %563 = vmatpush2.bf16.msra.mxu0 0
    %564 = vmatprep.subr.bf16.mxu0 0
    %565 = vmatpush2.bf16.msra.mxu0 0
    %566 = vmatprep.subr.bf16.mxu0 0
    %567 = vmatpush2.bf16.msra.mxu0 0
    %568 = vmatprep.subr.bf16.mxu0 0
    %569 = vmatpush2.bf16.msra.mxu0 0
    %570 = vmatprep.mubr.bf16.mxu0 0
    %571 = vmatmul.mubr.bf16.gmra.mxu0 %v536
    %v572 = vpop.f32.mrf.mxu0
    %v573 = vadd.f32 0.0, %v572
    %v574 = vpop.f32.mrf.mxu0
    %v575 = vpop.f32.mrf.mxu0
    %v576 = vpop.f32.mrf.mxu0
    %577 = vdwg.mxu0
    %v578 = vadd.f32 %v164, %v573
    %v579 = vtanh.pop %v578
    %v580 = vmul.f32 %v579, 0.5
    %v581 = vadd.f32 %v580, 0.5
    %v582 = vmul.f32 %v581, %v524
    %584 = vrot.lane.b32.xlu0 %v579, 64
    %v585 = vpop.permute.xlu0 %584
    %v587 = vmul.f32 %v581, %v585
    %589 = vrot.lane.b32.xlu0 %v587, 32
    %v590 = vpop.permute.xlu0 %589
    %v592 = vadd.f32 %v582, %v590
    %v593 = vtanh.pop %v592
    %595 = vrot.lane.b32.xlu0 %v593, 64
    %v596 = vpop.permute.xlu0 %595
    %v598 = vmul.f32 %v581, %v596
    %v599 = vpack.c.bf16 %v598, %v598
    %601 = vrot.lane.b32.xlu0 %v599, 32
    %v602 = vpop.permute.xlu0 %601
    %v604 = vsel %vm190, %v602, 0
    %606 = vmatprep.subr.bf16.mxu0 0
    %607 = vmatpush1.bf16.msra.mxu0 0
    %608 = vmatprep.subr.bf16.mxu0 0
    %609 = vmatpush1.bf16.msra.mxu0 0
    %610 = vmatprep.subr.bf16.mxu0 0
    %611 = vmatpush1.bf16.msra.mxu0 0
    %612 = vmatprep.subr.bf16.mxu0 0
    %613 = vmatpush1.bf16.msra.mxu0 0
    %614 = vmatprep.subr.bf16.mxu0 0
    %615 = vmatpush1.bf16.msra.mxu0 0
    %616 = vmatprep.subr.bf16.mxu0 0
    %617 = vmatpush1.bf16.msra.mxu0 0
    %618 = vmatprep.subr.bf16.mxu0 0
    %619 = vmatpush1.bf16.msra.mxu0 %v187
    %620 = vmatprep.subr.bf16.mxu0 0
    %621 = vmatpush1.bf16.msra.mxu0 %v186
    %622 = vmatprep.subr.bf16.mxu0 0
    %623 = vmatpush2.bf16.msra.mxu0 0
    %624 = vmatprep.subr.bf16.mxu0 0
    %625 = vmatpush2.bf16.msra.mxu0 0
    %626 = vmatprep.subr.bf16.mxu0 0
    %627 = vmatpush2.bf16.msra.mxu0 0
    %628 = vmatprep.subr.bf16.mxu0 0
    %629 = vmatpush2.bf16.msra.mxu0 0
    %630 = vmatprep.subr.bf16.mxu0 0
    %631 = vmatpush2.bf16.msra.mxu0 0
    %632 = vmatprep.subr.bf16.mxu0 0
    %633 = vmatpush2.bf16.msra.mxu0 0
    %634 = vmatprep.subr.bf16.mxu0 0
    %635 = vmatpush2.bf16.msra.mxu0 0
    %636 = vmatprep.subr.bf16.mxu0 0
    %637 = vmatpush2.bf16.msra.mxu0 0
    %638 = vmatprep.mubr.bf16.mxu0 0
    %639 = vmatmul.mubr.bf16.gmra.mxu0 %v604
    %v640 = vpop.f32.mrf.mxu0
    %v641 = vadd.f32 0.0, %v640
    %v642 = vpop.f32.mrf.mxu0
    %v643 = vpop.f32.mrf.mxu0
    %v644 = vpop.f32.mrf.mxu0
    %645 = vdwg.mxu0
    %v646 = vadd.f32 %v169, %v641
    %v647 = vtanh.pop %v646
    %v648 = vmul.f32 %v647, 0.5
    %v649 = vadd.f32 %v648, 0.5
    %v650 = vmul.f32 %v649, %v592
    %652 = vrot.lane.b32.xlu0 %v647, 64
    %v653 = vpop.permute.xlu0 %652
    %v655 = vmul.f32 %v649, %v653
    %657 = vrot.lane.b32.xlu0 %v655, 32
    %v658 = vpop.permute.xlu0 %657
    %v660 = vadd.f32 %v650, %v658
    %v661 = vtanh.pop %v660
    %663 = vrot.lane.b32.xlu0 %v661, 64
    %v664 = vpop.permute.xlu0 %663
    %v666 = vmul.f32 %v649, %v664
    %v667 = vpack.c.bf16 %v666, %v666
    %669 = vrot.lane.b32.xlu0 %v667, 32
    %v670 = vpop.permute.xlu0 %669
    %v672 = vsel %vm190, %v670, 0
    %674 = vmatprep.subr.bf16.mxu0 0
    %675 = vmatpush1.bf16.msra.mxu0 0
    %676 = vmatprep.subr.bf16.mxu0 0
    %677 = vmatpush1.bf16.msra.mxu0 0
    %678 = vmatprep.subr.bf16.mxu0 0
    %679 = vmatpush1.bf16.msra.mxu0 0
    %680 = vmatprep.subr.bf16.mxu0 0
    %681 = vmatpush1.bf16.msra.mxu0 0
    %682 = vmatprep.subr.bf16.mxu0 0
    %683 = vmatpush1.bf16.msra.mxu0 0
    %684 = vmatprep.subr.bf16.mxu0 0
    %685 = vmatpush1.bf16.msra.mxu0 0
    %686 = vmatprep.subr.bf16.mxu0 0
    %687 = vmatpush1.bf16.msra.mxu0 %v187
    %688 = vmatprep.subr.bf16.mxu0 0
    %689 = vmatpush1.bf16.msra.mxu0 %v186
    %690 = vmatprep.subr.bf16.mxu0 0
    %691 = vmatpush2.bf16.msra.mxu0 0
    %692 = vmatprep.subr.bf16.mxu0 0
    %693 = vmatpush2.bf16.msra.mxu0 0
    %694 = vmatprep.subr.bf16.mxu0 0
    %695 = vmatpush2.bf16.msra.mxu0 0
    %696 = vmatprep.subr.bf16.mxu0 0
    %697 = vmatpush2.bf16.msra.mxu0 0
    %698 = vmatprep.subr.bf16.mxu0 0
    %699 = vmatpush2.bf16.msra.mxu0 0
    %700 = vmatprep.subr.bf16.mxu0 0
    %701 = vmatpush2.bf16.msra.mxu0 0
    %702 = vmatprep.subr.bf16.mxu0 0
    %703 = vmatpush2.bf16.msra.mxu0 0
    %704 = vmatprep.subr.bf16.mxu0 0
    %705 = vmatpush2.bf16.msra.mxu0 0
    %706 = vmatprep.mubr.bf16.mxu0 0
    %707 = vmatmul.mubr.bf16.gmra.mxu0 %v672
    %v708 = vpop.f32.mrf.mxu0
    %v709 = vadd.f32 0.0, %v708
    %v710 = vpop.f32.mrf.mxu0
    %v711 = vpop.f32.mrf.mxu0
    %v712 = vpop.f32.mrf.mxu0
    %713 = vdwg.mxu0
    %v714 = vadd.f32 %v172, %v709
    %v715 = vtanh.pop %v714
    %v716 = vmul.f32 %v715, 0.5
    %v717 = vadd.f32 %v716, 0.5
    %v718 = vmul.f32 %v717, %v660
    %720 = vrot.lane.b32.xlu0 %v715, 64
    %v721 = vpop.permute.xlu0 %720
    %v723 = vmul.f32 %v717, %v721
    %725 = vrot.lane.b32.xlu0 %v723, 32
    %v726 = vpop.permute.xlu0 %725
    %v728 = vadd.f32 %v718, %v726
    %v729 = vtanh.pop %v728
    %731 = vrot.lane.b32.xlu0 %v729, 64
    %v732 = vpop.permute.xlu0 %731
    %v734 = vmul.f32 %v717, %v732
    %v735 = vpack.c.bf16 %v734, %v734
    %v736 = vlaneseq
    %v737 = vshrl.u32 %v736, 7
    %v738 = vsub.s32 0, %v737
    %v739 = vrot.slane %v52, %v738
    %741 = vrot.lane.b32.xlu0 %v735, 32
    %v742 = vpop.permute.xlu0 %741
    %v747 = vunpack.c.l.b16 %v39
    %v748 = vunpack.c.l.b16 %v40
    %v749 = vunpack.c.l.b16 %v41
    %v750 = vunpack.c.l.b16 %v42
    %v751 = vpack.c.b16 %v748, %v747
    %v752 = vpack.c.b16 %v750, %v749
    %v756 = vsel %vm190, %v742, 0
    %758 = vmatprep.subr.bf16.mxu0 0
    %759 = vmatpush1.bf16.msra.mxu0 0
    %760 = vmatprep.subr.bf16.mxu0 0
    %761 = vmatpush1.bf16.msra.mxu0 0
    %762 = vmatprep.subr.bf16.mxu0 0
    %763 = vmatpush1.bf16.msra.mxu0 0
    %764 = vmatprep.subr.bf16.mxu0 0
    %765 = vmatpush1.bf16.msra.mxu0 0
    %766 = vmatprep.subr.bf16.mxu0 0
    %767 = vmatpush1.bf16.msra.mxu0 0
    %768 = vmatprep.subr.bf16.mxu0 0
    %769 = vmatpush1.bf16.msra.mxu0 0
    %770 = vmatprep.subr.bf16.mxu0 0
    %771 = vmatpush1.bf16.msra.mxu0 %v752
    %772 = vmatprep.subr.bf16.mxu0 0
    %773 = vmatpush1.bf16.msra.mxu0 %v751
    %774 = vmatprep.subr.bf16.mxu0 0
    %775 = vmatpush2.bf16.msra.mxu0 0
    %776 = vmatprep.subr.bf16.mxu0 0
    %777 = vmatpush2.bf16.msra.mxu0 0
    %778 = vmatprep.subr.bf16.mxu0 0
    %779 = vmatpush2.bf16.msra.mxu0 0
    %780 = vmatprep.subr.bf16.mxu0 0
    %781 = vmatpush2.bf16.msra.mxu0 0
    %782 = vmatprep.subr.bf16.mxu0 0
    %783 = vmatpush2.bf16.msra.mxu0 0
    %784 = vmatprep.subr.bf16.mxu0 0
    %785 = vmatpush2.bf16.msra.mxu0 0
    %786 = vmatprep.subr.bf16.mxu0 0
    %787 = vmatpush2.bf16.msra.mxu0 0
    %788 = vmatprep.subr.bf16.mxu0 0
    %789 = vmatpush2.bf16.msra.mxu0 0
    %790 = vmatprep.mubr.bf16.mxu0 0
    %791 = vmatmul.mubr.bf16.gmra.mxu0 %v756
    %v792 = vpop.f32.mrf.mxu0
    %v793 = vadd.f32 %v739, %v792
    %v794 = vpop.f32.mrf.mxu0
    %v795 = vpop.f32.mrf.mxu0
    %v796 = vpop.f32.mrf.mxu0
    %797 = vdwg.mxu0
    %v798 = vtanh.pop %v793
    %v799 = vmul.f32 %v798, 0.5
    %v800 = vadd.f32 %v799, 0.5
    %v801 = vmul.f32 %v800, %v728
    %803 = vrot.lane.b32.xlu0 %v798, 64
    %v804 = vpop.permute.xlu0 %803
    %v806 = vmul.f32 %v800, %v804
    %808 = vrot.lane.b32.xlu0 %v806, 32
    %v809 = vpop.permute.xlu0 %808
    %v811 = vadd.f32 %v801, %v809
    %v812 = vtanh.pop %v811
    %814 = vrot.lane.b32.xlu0 %v812, 64
    %v815 = vpop.permute.xlu0 %814
    %v817 = vmul.f32 %v800, %v815
    %v818 = vpack.c.bf16 %v817, %v817
    %820 = vrot.lane.b32.xlu0 %v818, 32
    %v821 = vpop.permute.xlu0 %820
    %v826 = vunpack.c.l.b16 %v43
    %v827 = vunpack.c.l.b16 %v44
    %v828 = vunpack.c.l.b16 %v45
    %v829 = vunpack.c.l.b16 %v46
    %v830 = vpack.c.b16 %v827, %v826
    %v831 = vpack.c.b16 %v829, %v828
    %v835 = vsel %vm190, %v821, 0
    %837 = vmatprep.subr.bf16.mxu0 0
    %838 = vmatpush1.bf16.msra.mxu0 0
    %839 = vmatprep.subr.bf16.mxu0 0
    %840 = vmatpush1.bf16.msra.mxu0 0
    %841 = vmatprep.subr.bf16.mxu0 0
    %842 = vmatpush1.bf16.msra.mxu0 0
    %843 = vmatprep.subr.bf16.mxu0 0
    %844 = vmatpush1.bf16.msra.mxu0 0
    %845 = vmatprep.subr.bf16.mxu0 0
    %846 = vmatpush1.bf16.msra.mxu0 0
    %847 = vmatprep.subr.bf16.mxu0 0
    %848 = vmatpush1.bf16.msra.mxu0 0
    %849 = vmatprep.subr.bf16.mxu0 0
    %850 = vmatpush1.bf16.msra.mxu0 %v831
    %851 = vmatprep.subr.bf16.mxu0 0
    %852 = vmatpush1.bf16.msra.mxu0 %v830
    %853 = vmatprep.subr.bf16.mxu0 0
    %854 = vmatpush2.bf16.msra.mxu0 0
    %855 = vmatprep.subr.bf16.mxu0 0
    %856 = vmatpush2.bf16.msra.mxu0 0
    %857 = vmatprep.subr.bf16.mxu0 0
    %858 = vmatpush2.bf16.msra.mxu0 0
    %859 = vmatprep.subr.bf16.mxu0 0
    %860 = vmatpush2.bf16.msra.mxu0 0
    %861 = vmatprep.subr.bf16.mxu0 0
    %862 = vmatpush2.bf16.msra.mxu0 0
    %863 = vmatprep.subr.bf16.mxu0 0
    %864 = vmatpush2.bf16.msra.mxu0 0
    %865 = vmatprep.subr.bf16.mxu0 0
    %866 = vmatpush2.bf16.msra.mxu0 0
    %867 = vmatprep.subr.bf16.mxu0 0
    %868 = vmatpush2.bf16.msra.mxu0 0
    %869 = vmatprep.mubr.bf16.mxu0 0
    %870 = vmatmul.mubr.bf16.gmra.mxu0 %v835
    %v871 = vpop.f32.mrf.mxu0
    %v872 = vadd.f32 %v57, %v871
    %v873 = vpop.f32.mrf.mxu0
    %v874 = vpop.f32.mrf.mxu0
    %v875 = vpop.f32.mrf.mxu0
    %876 = vdwg.mxu0
    %v877 = vtanh.pop %v872
    %v878 = vmul.f32 %v877, 0.5
    %v879 = vadd.f32 %v878, 0.5
    %v880 = vmul.f32 %v879, %v811
    %882 = vrot.lane.b32.xlu0 %v877, 64
    %v883 = vpop.permute.xlu0 %882
    %v885 = vmul.f32 %v879, %v883
    %887 = vrot.lane.b32.xlu0 %v885, 32
    %v888 = vpop.permute.xlu0 %887
    %v890 = vadd.f32 %v880, %v888
    %v891 = vtanh.pop %v890
    %893 = vrot.lane.b32.xlu0 %v891, 64
    %v894 = vpop.permute.xlu0 %893
    %v896 = vmul.f32 %v879, %v894
    %v897 = vadd.f32 %v817, %v896
    %v898 = vpack.c.bf16 %v896, %v896
    %900 = vrot.lane.b32.xlu0 %v898, 32
    %v901 = vpop.permute.xlu0 %900
    %v903 = vsel %vm190, %v901, 0
    %905 = vmatprep.subr.bf16.mxu0 0
    %906 = vmatpush1.bf16.msra.mxu0 0
    %907 = vmatprep.subr.bf16.mxu0 0
    %908 = vmatpush1.bf16.msra.mxu0 0
    %909 = vmatprep.subr.bf16.mxu0 0
    %910 = vmatpush1.bf16.msra.mxu0 0
    %911 = vmatprep.subr.bf16.mxu0 0
    %912 = vmatpush1.bf16.msra.mxu0 0
    %913 = vmatprep.subr.bf16.mxu0 0
    %914 = vmatpush1.bf16.msra.mxu0 0
    %915 = vmatprep.subr.bf16.mxu0 0
    %916 = vmatpush1.bf16.msra.mxu0 0
    %917 = vmatprep.subr.bf16.mxu0 0
    %918 = vmatpush1.bf16.msra.mxu0 %v831
    %919 = vmatprep.subr.bf16.mxu0 0
    %920 = vmatpush1.bf16.msra.mxu0 %v830
    %921 = vmatprep.subr.bf16.mxu0 0
    %922 = vmatpush2.bf16.msra.mxu0 0
    %923 = vmatprep.subr.bf16.mxu0 0
    %924 = vmatpush2.bf16.msra.mxu0 0
    %925 = vmatprep.subr.bf16.mxu0 0
    %926 = vmatpush2.bf16.msra.mxu0 0
    %927 = vmatprep.subr.bf16.mxu0 0
    %928 = vmatpush2.bf16.msra.mxu0 0
    %929 = vmatprep.subr.bf16.mxu0 0
    %930 = vmatpush2.bf16.msra.mxu0 0
    %931 = vmatprep.subr.bf16.mxu0 0
    %932 = vmatpush2.bf16.msra.mxu0 0
    %933 = vmatprep.subr.bf16.mxu0 0
    %934 = vmatpush2.bf16.msra.mxu0 0
    %935 = vmatprep.subr.bf16.mxu0 0
    %936 = vmatpush2.bf16.msra.mxu0 0
    %937 = vmatprep.mubr.bf16.mxu0 0
    %938 = vmatmul.mubr.bf16.gmra.mxu0 %v903
    %v939 = vpop.f32.mrf.mxu0
    %v940 = vadd.f32 %v57, %v939
    %v941 = vpop.f32.mrf.mxu0
    %v942 = vpop.f32.mrf.mxu0
    %v943 = vpop.f32.mrf.mxu0
    %944 = vdwg.mxu0
    %v945 = vtanh.pop %v940
    %v946 = vmul.f32 %v945, 0.5
    %v947 = vadd.f32 %v946, 0.5
    %v948 = vmul.f32 %v947, %v890
    %950 = vrot.lane.b32.xlu0 %v945, 64
    %v951 = vpop.permute.xlu0 %950
    %v953 = vmul.f32 %v947, %v951
    %955 = vrot.lane.b32.xlu0 %v953, 32
    %v956 = vpop.permute.xlu0 %955
    %v958 = vadd.f32 %v948, %v956
    %v959 = vtanh.pop %v958
    %961 = vrot.lane.b32.xlu0 %v959, 64
    %v962 = vpop.permute.xlu0 %961
    %v964 = vmul.f32 %v947, %v962
    %v965 = vadd.f32 %v897, %v964
    %v966 = vpack.c.bf16 %v964, %v964
    %968 = vrot.lane.b32.xlu0 %v966, 32
    %v969 = vpop.permute.xlu0 %968
    %v971 = vsel %vm190, %v969, 0
    %973 = vmatprep.subr.bf16.mxu0 0
    %974 = vmatpush1.bf16.msra.mxu0 0
    %975 = vmatprep.subr.bf16.mxu0 0
    %976 = vmatpush1.bf16.msra.mxu0 0
    %977 = vmatprep.subr.bf16.mxu0 0
    %978 = vmatpush1.bf16.msra.mxu0 0
    %979 = vmatprep.subr.bf16.mxu0 0
    %980 = vmatpush1.bf16.msra.mxu0 0
    %981 = vmatprep.subr.bf16.mxu0 0
    %982 = vmatpush1.bf16.msra.mxu0 0
    %983 = vmatprep.subr.bf16.mxu0 0
    %984 = vmatpush1.bf16.msra.mxu0 0
    %985 = vmatprep.subr.bf16.mxu0 0
    %986 = vmatpush1.bf16.msra.mxu0 %v831
    %987 = vmatprep.subr.bf16.mxu0 0
    %988 = vmatpush1.bf16.msra.mxu0 %v830
    %989 = vmatprep.subr.bf16.mxu0 0
    %990 = vmatpush2.bf16.msra.mxu0 0
    %991 = vmatprep.subr.bf16.mxu0 0
    %992 = vmatpush2.bf16.msra.mxu0 0
    %993 = vmatprep.subr.bf16.mxu0 0
    %994 = vmatpush2.bf16.msra.mxu0 0
    %995 = vmatprep.subr.bf16.mxu0 0
    %996 = vmatpush2.bf16.msra.mxu0 0
    %997 = vmatprep.subr.bf16.mxu0 0
    %998 = vmatpush2.bf16.msra.mxu0 0
    %999 = vmatprep.subr.bf16.mxu0 0
    %1000 = vmatpush2.bf16.msra.mxu0 0
    %1001 = vmatprep.subr.bf16.mxu0 0
    %1002 = vmatpush2.bf16.msra.mxu0 0
    %1003 = vmatprep.subr.bf16.mxu0 0
    %1004 = vmatpush2.bf16.msra.mxu0 0
    %1005 = vmatprep.mubr.bf16.mxu0 0
    %1006 = vmatmul.mubr.bf16.gmra.mxu0 %v971
    %v1007 = vpop.f32.mrf.mxu0
    %v1008 = vadd.f32 %v57, %v1007
    %v1009 = vpop.f32.mrf.mxu0
    %v1010 = vpop.f32.mrf.mxu0
    %v1011 = vpop.f32.mrf.mxu0
    %1012 = vdwg.mxu0
    %v1013 = vtanh.pop %v1008
    %v1014 = vmul.f32 %v1013, 0.5
    %v1015 = vadd.f32 %v1014, 0.5
    %v1016 = vmul.f32 %v1015, %v958
    %1018 = vrot.lane.b32.xlu0 %v1013, 64
    %v1019 = vpop.permute.xlu0 %1018
    %v1021 = vmul.f32 %v1015, %v1019
    %1023 = vrot.lane.b32.xlu0 %v1021, 32
    %v1024 = vpop.permute.xlu0 %1023
    %v1026 = vadd.f32 %v1016, %v1024
    %v1027 = vtanh.pop %v1026
    %1029 = vrot.lane.b32.xlu0 %v1027, 64
    %v1030 = vpop.permute.xlu0 %1029
    %v1032 = vmul.f32 %v1015, %v1030
    %v1033 = vadd.f32 %v965, %v1032
    %v1034 = vpack.c.bf16 %v1033, %v1033
    %v1035 = vlaneseq
    %v1036 = vshrl.u32 %v1035, 7
    %v1037 = vsub.s32 0, %v1036
    %v1038 = vrot.slane %v58, %v1037
    %1040 = vrot.lane.b32.xlu0 %v1034, 32
    %v1041 = vpop.permute.xlu0 %1040
    %v1046 = vunpack.c.l.b16 %v47
    %v1047 = vunpack.c.l.b16 %v48
    %v1048 = vunpack.c.l.b16 %v49
    %v1049 = vunpack.c.l.b16 %v50
    %v1050 = vpack.c.b16 %v1047, %v1046
    %v1051 = vpack.c.b16 %v1049, %v1048
    %v1055 = vsel %vm190, %v1041, 0
    %1057 = vmatprep.subr.bf16.mxu0 0
    %1058 = vmatpush1.bf16.msra.mxu0 0
    %1059 = vmatprep.subr.bf16.mxu0 0
    %1060 = vmatpush1.bf16.msra.mxu0 0
    %1061 = vmatprep.subr.bf16.mxu0 0
    %1062 = vmatpush1.bf16.msra.mxu0 0
    %1063 = vmatprep.subr.bf16.mxu0 0
    %1064 = vmatpush1.bf16.msra.mxu0 0
    %1065 = vmatprep.subr.bf16.mxu0 0
    %1066 = vmatpush1.bf16.msra.mxu0 0
    %1067 = vmatprep.subr.bf16.mxu0 0
    %1068 = vmatpush1.bf16.msra.mxu0 0
    %1069 = vmatprep.subr.bf16.mxu0 0
    %1070 = vmatpush1.bf16.msra.mxu0 %v1051
    %1071 = vmatprep.subr.bf16.mxu0 0
    %1072 = vmatpush1.bf16.msra.mxu0 %v1050
    %1073 = vmatprep.subr.bf16.mxu0 0
    %1074 = vmatpush2.bf16.msra.mxu0 0
    %1075 = vmatprep.subr.bf16.mxu0 0
    %1076 = vmatpush2.bf16.msra.mxu0 0
    %1077 = vmatprep.subr.bf16.mxu0 0
    %1078 = vmatpush2.bf16.msra.mxu0 0
    %1079 = vmatprep.subr.bf16.mxu0 0
    %1080 = vmatpush2.bf16.msra.mxu0 0
    %1081 = vmatprep.subr.bf16.mxu0 0
    %1082 = vmatpush2.bf16.msra.mxu0 0
    %1083 = vmatprep.subr.bf16.mxu0 0
    %1084 = vmatpush2.bf16.msra.mxu0 0
    %1085 = vmatprep.subr.bf16.mxu0 0
    %1086 = vmatpush2.bf16.msra.mxu0 0
    %1087 = vmatprep.subr.bf16.mxu0 0
    %1088 = vmatpush2.bf16.msra.mxu0 0
    %1089 = vmatprep.mubr.bf16.mxu0 0
    %1090 = vmatmul.mubr.bf16.gmra.mxu0 %v1055
    %v1091 = vpop.f32.mrf.mxu0
    %v1092 = vadd.f32 %v1038, %v1091
    %v1093 = vpop.f32.mrf.mxu0
    %v1094 = vpop.f32.mrf.mxu0
    %v1095 = vpop.f32.mrf.mxu0
    %1096 = vdwg.mxu0
    %v1097 = vxor.u32 %v1092, 2147483648
    %v1098 = vmul.f32 %v1097, 1.442695
    %v1099 = vpow.pop %v1098
    %v1100 = vadd.f32 %v1099, 1.0
    %v1101 = vrcp.pop %v1100
    %v1102 = vmul.f32 1.0, %v1101
    %1103 = vst [vmem:[#allocation5] sm:$0xff] %v1102
    // Predicated region
    $region22: #{tpu_custom_call.1} parent=1 // pred_check
      _
    $region23: #{tpu_custom_call.1} parent=1 // pred_check_branch
      %1105 = sbr.rel (0) target = $region25
    $region24: #{tpu_custom_call.1} parent=1 // pred_region
      %s1107 = ssub.s32 128, 128
      %1108 = vsyncadd [#allocation4], %s1107
      %s1110 = sshll.u32 [#allocation5], 4
      %s1111 = int_to_ptr.vmem [resolvable:$true] %s1110
      %1113 = dma.vmem_to_hbm [thread:$0]  %s1111, 128, %s4, [#allocation4]
    $region25: #{tpu_custom_call.1} parent=1 // pred_fallthru
      _
    // Predicated region
    $region26: #{tpu_custom_call.1} parent=1 // pred_check
      _
    $region27: #{tpu_custom_call.1} parent=1 // pred_check_branch
      %1115 = sbr.rel (0) target = $region29
    $region28: #{tpu_custom_call.1} parent=1 // pred_region
      %1116 = dma.done [#allocation4], 128
    $region29: #{tpu_custom_call.1} parent=1 // pred_fallthru
      _
    %1117 = vsyncpa [#allocation3], 1
    %1118 = vsyncpa [#allocation4], 1

</llo_original>
